<compile_context>
chip_gen: v6e
topology: v6e:2x2x1
jax: 0.10.0
libtpu: 0.0.40
codegen_flags: <defaults>
</compile_context>

<pallas_src>
import functools

import numpy as np
import jax
import jax.numpy as jnp
from jax import lax
from jax.experimental import pallas as pl
from jax.experimental.pallas import tpu as pltpu


# ----------------------------------------------------------------------------
# Helpers
# ----------------------------------------------------------------------------
def update_shape(shape, k):
    return (shape[0] - k + 1, shape[1] - k + 1)


def _padded_stride(per_chan, n_chans, align=128):
    """Smallest per-channel stride >= per_chan with n_chans*stride % align == 0."""
    m = per_chan
    while (n_chans * m) % align != 0:
        m += 1
    return m


def _dense_valid_conv_matrix(w, in_hw, out_hw, in_stride, out_stride):
    """Dense matrix of a VALID conv with per-channel (padded) strides.

    w: (Cout, Cin, k, k).  Input flattened as  ci*in_stride  + r*W  + c,
    output flattened as               co*out_stride + i*Wo + j.
    Padded rows/columns stay zero, so lane padding is mathematically inert.
    """
    w = np.asarray(w, np.float32)
    cout, cin, k, _ = w.shape
    H, W = in_hw
    Ho, Wo = out_hw
    dense = np.zeros((cin * in_stride, cout * out_stride), np.float32)
    co, ci, di, dj, i, j = np.meshgrid(
        np.arange(cout), np.arange(cin), np.arange(k), np.arange(k),
        np.arange(Ho), np.arange(Wo), indexing="ij")
    rows = (ci * in_stride + (i + di) * W + (j + dj)).ravel()
    cols = (co * out_stride + i * Wo + j).ravel()
    np.add.at(dense, (rows, cols), w[co, ci, di, dj].ravel())
    return dense


# ----------------------------------------------------------------------------
# Shared single-timestep math (operates on values; refs handled by the kernels)
# ----------------------------------------------------------------------------
def _step_math(x_bf16, R, A, I1, I2, w1, b1, kp, w2, b2, w3):
    """One forward step. x_bf16:(B,CinHW) bf16; states:(B,CN) f32; kp:(8,CN) f32."""
    # bipolar: dense conv1 (MXU matmul, bf16 weights, f32 accumulate) + sigmoid
    z1 = jnp.dot(x_bf16, w1, preferred_element_type=jnp.float32) + b1
    u = pl.reciprocal(1.0 + jnp.exp(-z1), approx=True)          # EUP exp + vrcp

    # kinetics: Euler step with dt pre-folded into the rate rows
    dka, dkfi, dkfr = kp[0:1], kp[1:2], kp[2:3]
    dksi, dksr = kp[3:4], kp[4:5]
    w0, w1d, bb = kp[5:6], kp[6:7], kp[7:8]                     # w1d = w[...,1]/dt

    drive = dka * u * R            # dt*ka*u*R
    t_kfiA = dkfi * A
    t_kfrI1 = dkfr * I1
    t_ksiI1 = dksi * I1
    t_ksrI2 = dksr * I2

    dA_sc = drive - t_kfiA         # = dt * dA/dt (analytic deriv, no cancellation)
    Rn = R - drive + t_kfrI1
    An = A + dA_sc
    I1n = I1 + t_kfiA + t_ksrI2 - t_kfrI1 - t_ksiI1
    I2n = I2 + t_ksiI1 - t_ksrI2

    # w·(fx, deriv) + b, spiking-block ReLU    (w1d*dA_sc == w[...,1]*deriv)
    spk = jnp.maximum(w0 * An + w1d * dA_sc + bb, 0.0)

    # amacrine: dense conv2 (MXU matmul) + bias + ReLU
    z2 = jnp.dot(spk.astype(jnp.bfloat16), w2,
                 preferred_element_type=jnp.float32) + b2
    a2 = jnp.maximum(z2, 0.0)

    # ganglion: Linear (no bias) + Softplus
    g = jnp.dot(a2.astype(jnp.bfloat16), w3, preferred_element_type=jnp.float32)
    out = jnp.logaddexp(g, 0.0)
    return out, Rn, An, I1n, I2n


# ----------------------------------------------------------------------------
# Kernels
# ----------------------------------------------------------------------------
def _single_step_kernel(x_ref, hs_ref, w1_ref, b1_ref, kp_ref, w2_ref, b2_ref,
                        w3_ref, out_ref, hs_new_ref, *, B):
    hs = hs_ref[...]                                       # (4B, CN) f32
    out, Rn, An, I1n, I2n = _step_math(
        x_ref[...], hs[0:B], hs[B:2 * B], hs[2 * B:3 * B], hs[3 * B:4 * B],
        w1_ref[...], b1_ref[...], kp_ref[...], w2_ref[...], b2_ref[...], w3_ref[...])
    hs_new_ref[0:B, :] = Rn
    hs_new_ref[B:2 * B, :] = An
    hs_new_ref[2 * B:3 * B, :] = I1n
    hs_new_ref[3 * B:4 * B, :] = I2n
    out_ref[...] = out


def _rollout_kernel(x_ref, hs0_ref, w1_ref, b1_ref, kp_ref, w2_ref, b2_ref,
                    w3_ref, out_ref, hsf_ref, *, B):
    # hsf_ref's block index is constant across the grid -> it stays VMEM-resident
    # and doubles as the recurrent carry; weights are DMA'd once for all T steps.
    @pl.when(pl.program_id(0) == 0)
    def _():
        hsf_ref[...] = hs0_ref[...]

    hs = hsf_ref[...]
    out, Rn, An, I1n, I2n = _step_math(
        x_ref[0], hs[0:B], hs[B:2 * B], hs[2 * B:3 * B], hs[3 * B:4 * B],
        w1_ref[...], b1_ref[...], kp_ref[...], w2_ref[...], b2_ref[...], w3_ref[...])
    hsf_ref[0:B, :] = Rn
    hsf_ref[B:2 * B, :] = An
    hsf_ref[2 * B:3 * B, :] = I1n
    hsf_ref[3 * B:4 * B, :] = I2n
    out_ref[0] = out


# ----------------------------------------------------------------------------
# Model
# ----------------------------------------------------------------------------
class KineticsChannelModelDerivPallas:
    def __init__(self, key, n_units=5, chans=(4, 4), img_shape=(4, 16, 16),
                 ksizes=(7, 5), dt=0.01):
        self.n_units = n_units
        self.chans = chans
        self.img_shape = img_shape
        self.ksizes = ksizes
        self.dt = float(dt)

        shape1 = update_shape(img_shape[1:], ksizes[0])   # after bipolar conv
        shape2 = update_shape(shape1, ksizes[1])          # after amacrine conv
        self.shape1, self.shape2 = shape1, shape2
        self.N = shape1[0] * shape1[1]
        self.M2 = shape2[0] * shape2[1]
        self.h_shapes = (4, chans[0], self.N)
        self.in_dim = img_shape[0] * img_shape[1] * img_shape[2]

        c0, c1 = chans
        k1, k2 = ksizes
        # lane-dense padded per-channel strides
        self.Npad = _padded_stride(self.N, c0)            # 100 -> 128
        self.M2pad = _padded_stride(self.M2, c1)          # 36  -> 64
        self.cn_pad = c0 * self.Npad                      # 512
        self.m2p_total = c1 * self.M2pad                  # 256

        ks = jax.random.split(key, 12)
        fan1 = img_shape[0] * k1 * k1
        fan2 = c0 * k2 * k2
        fan3 = c1 * self.M2

        # LinearStackedConv2d is a purely linear conv stack -> equivalent single
        # VALID conv (synthetic weights here).
        self.conv1_w = jax.random.uniform(ks[0], (c0, img_shape[0], k1, k1),
                                          minval=-1.0, maxval=1.0) / jnp.sqrt(fan1)
        self.conv1_b = jax.random.uniform(ks[1], (c0,), minval=-0.1, maxval=0.1)
        self.conv2_w = jax.random.uniform(ks[2], (c1, c0, k2, k2),
                                          minval=-1.0, maxval=1.0) / jnp.sqrt(fan2)
        self.conv2_b = jax.random.uniform(ks[3], (c1,), minval=-0.1, maxval=0.1)
        self.lin_w = jax.random.uniform(ks[4], (n_units, fan3),
                                        minval=-1.0, maxval=1.0) / jnp.sqrt(fan3)

        # kinetics rate constants (one per channel, torch.rand-style init)
        self.ka = jax.random.uniform(ks[5], (c0,))
        self.kfi = jax.random.uniform(ks[6], (c0,))
        self.kfr = jax.random.uniform(ks[7], (c0,))
        self.ksi = jax.random.uniform(ks[8], (c0,))
        self.ksr = jax.random.uniform(ks[9], (c0,))
        self.w = jax.random.uniform(ks[10], (c0, 1, 2))   # (C,1,2) as in reference
        self.b = jax.random.uniform(ks[11], (c0, 1))      # (C,1)

        # ---- init-time folding into kernel-friendly, lane-dense, bf16 operands ----
        H, W = img_shape[1:]
        w1d = _dense_valid_conv_matrix(self.conv1_w, (H, W), shape1,
                                       in_stride=H * W, out_stride=self.Npad)
        w2d = _dense_valid_conv_matrix(self.conv2_w, shape1, shape2,
                                       in_stride=self.Npad, out_stride=self.M2pad)
        self.w1_dense = jnp.asarray(w1d, jnp.bfloat16)    # (CinHW, C0*Npad)
        self.w2_dense = jnp.asarray(w2d, jnp.bfloat16)    # (C0*Npad, C1*M2pad)

        lw = np.asarray(self.lin_w, np.float32)           # (n_units, C1*M2)
        w3p = np.zeros((self.m2p_total, n_units), np.float32)
        for cc in range(c1):
            w3p[cc * self.M2pad:cc * self.M2pad + self.M2, :] = \
                lw[:, cc * self.M2:(cc + 1) * self.M2].T
        self.w3 = jnp.asarray(w3p, jnp.bfloat16)          # (C1*M2pad, n_units)

        b1p = np.zeros((1, self.cn_pad), np.float32)
        b2p = np.zeros((1, self.m2p_total), np.float32)
        c1b = np.asarray(self.conv1_b, np.float32)
        c2b = np.asarray(self.conv2_b, np.float32)
        for cc in range(c0):
            b1p[0, cc * self.Npad:cc * self.Npad + self.N] = c1b[cc]
        for cc in range(c1):
            b2p[0, cc * self.M2pad:cc * self.M2pad + self.M2] = c2b[cc]
        self.b1_row = jnp.asarray(b1p)
        self.b2_row = jnp.asarray(b2p)

        # 8 kinetics rows: dt*ka, dt*kfi, dt*kfr, dt*ksi, dt*ksr, w0, w1/dt, b
        kin8 = np.stack([
            self.dt * np.asarray(self.ka, np.float32),
            self.dt * np.asarray(self.kfi, np.float32),
            self.dt * np.asarray(self.kfr, np.float32),
            self.dt * np.asarray(self.ksi, np.float32),
            self.dt * np.asarray(self.ksr, np.float32),
            np.asarray(self.w[:, 0, 0], np.float32),
            np.asarray(self.w[:, 0, 1], np.float32) / self.dt,
            np.asarray(self.b[:, 0], np.float32)], axis=0)        # (8, C0)
        kinp = np.zeros((8, self.cn_pad), np.float32)
        for cc in range(c0):
            kinp[:, cc * self.Npad:cc * self.Npad + self.N] = kin8[:, cc:cc + 1]
        self.kin_params = jnp.asarray(kinp)               # (8, C0*Npad)

    # ---- state packing: (B,4,C0,N) <-> state-major lane-dense (4B, C0*Npad) ----
    def _pack_state(self, hs):
        B = hs.shape[0]
        c0 = self.chans[0]
        hs_t = jnp.transpose(hs.astype(jnp.float32), (1, 0, 2, 3))       # (4,B,C0,N)
        hs_t = jnp.pad(hs_t, ((0, 0), (0, 0), (0, 0), (0, self.Npad - self.N)))
        return hs_t.reshape(4 * B, c0 * self.Npad)

    def _unpack_state(self, packed, B):
        c0 = self.chans[0]
        hs = packed.reshape(4, B, c0, self.Npad)[:, :, :, :self.N]
        return jnp.transpose(hs, (1, 0, 2, 3))

    def _cost_estimate(self, T, B):
        flops = 2 * T * B * (self.in_dim * self.cn_pad
                             + self.cn_pad * self.m2p_total
                             + self.m2p_total * self.n_units)
        transcendentals = T * B * (self.cn_pad + self.n_units)
        weight_bytes = 2 * (self.w1_dense.size + self.w2_dense.size + self.w3.size)
        io_bytes = T * B * (2 * self.in_dim + 4 * self.n_units) + 8 * B * self.cn_pad * 4
        return pl.CostEstimate(flops=int(flops), transcendentals=int(transcendentals),
                               bytes_accessed=int(weight_bytes + io_bytes))

    # ---- single-step forward: matches the PyTorch module's forward(x, hs) ----
    def __call__(self, x, hs):
        B = x.shape[0]
        x_flat = x.reshape(B, -1).astype(jnp.bfloat16)     # bf16 MXU operand
        hs_packed = self._pack_state(hs)
        out, hs_new_packed = pl.pallas_call(
            functools.partial(_single_step_kernel, B=B),
            out_shape=(jax.ShapeDtypeStruct((B, self.n_units), jnp.float32),
                       jax.ShapeDtypeStruct((4 * B, self.cn_pad), jnp.float32)),
            input_output_aliases={1: 1},                   # hs updated in place
            cost_estimate=self._cost_estimate(1, B),
        )(x_flat, hs_packed, self.w1_dense, self.b1_row, self.kin_params,
          self.w2_dense, self.b2_row, self.w3)
        return out, self._unpack_state(hs_new_packed, B)

    # ---- fused T-step rollout: weights DMA'd once, state carried in VMEM ----
    def rollout(self, x_seq, hs):
        T, B = x_seq.shape[0], x_seq.shape[1]
        x_slab = x_seq.reshape(T, B, -1).astype(jnp.bfloat16)
        hs0 = self._pack_state(hs)
        cn, mt, nu, ind = self.cn_pad, self.m2p_total, self.n_units, self.in_dim
        const2 = lambda t: (0, 0)                          # same block every step

        out_seq, hs_final = pl.pallas_call(
            functools.partial(_rollout_kernel, B=B),
            grid=(T,),
            in_specs=[
                pl.BlockSpec((1, B, ind), lambda t: (t, 0, 0)),   # x[t]
                pl.BlockSpec((4 * B, cn), const2),                # hs0
                pl.BlockSpec((ind, cn), const2),                  # w1 (resident)
                pl.BlockSpec((1, cn), const2),                    # b1
                pl.BlockSpec((8, cn), const2),                    # kinetics rows
                pl.BlockSpec((cn, mt), const2),                   # w2 (resident)
                pl.BlockSpec((1, mt), const2),                    # b2
                pl.BlockSpec((mt, nu), const2),                   # w3 (resident)
            ],
            out_specs=(
                pl.BlockSpec((1, B, nu), lambda t: (t, 0, 0)),    # per-step output
                pl.BlockSpec((4 * B, cn), const2),                # resident carry
            ),
            out_shape=(jax.ShapeDtypeStruct((T, B, nu), jnp.float32),
                       jax.ShapeDtypeStruct((4 * B, cn), jnp.float32)),
            compiler_params=pltpu.CompilerParams(
                dimension_semantics=("arbitrary",)),              # recurrent carry
            cost_estimate=self._cost_estimate(T, B),
        )(x_slab, hs0, self.w1_dense, self.b1_row, self.kin_params,
          self.w2_dense, self.b2_row, self.w3)
        return out_seq, self._unpack_state(hs_final, B)


# ----------------------------------------------------------------------------
# Pure-JAX reference (f32, lax.conv) for correctness checking
# ----------------------------------------------------------------------------
def _reference_forward(model, x, hs):
    dt = model.dt
    B = x.shape[0]
    c0 = model.chans[0]
    dn = ("NCHW", "OIHW", "NCHW")
    z1 = lax.conv_general_dilated(x, model.conv1_w, (1, 1), "VALID",
                                  dimension_numbers=dn)
    z1 = z1 + model.conv1_b[None, :, None, None]
    u = jax.nn.sigmoid(z1).reshape(B, c0, model.N)
    R, A, I1, I2 = hs[:, 0], hs[:, 1], hs[:, 2], hs[:, 3]
    ka, kfi, kfr = (model.ka[None, :, None], model.kfi[None, :, None],
                    model.kfr[None, :, None])
    ksi, ksr = model.ksi[None, :, None], model.ksr[None, :, None]
    drive = ka * u * R
    Rn = R + dt * (kfr * I1 - drive)
    An = A + dt * (drive - kfi * A)
    I1n = I1 + dt * (kfi * A + ksr * I2 - (kfr + ksi) * I1)
    I2n = I2 + dt * (ksi * I1 - ksr * I2)
    hs_new = jnp.stack([Rn, An, I1n, I2n], axis=1)
    deriv = (hs_new[:, 1] - hs[:, 1]) / dt
    fx = (model.w[None, :, 0, 0, None] * An
          + model.w[None, :, 0, 1, None] * deriv
          + model.b[None, :, 0, None])
    spk = jnp.maximum(fx, 0.0).reshape(B, c0, model.shape1[0], model.shape1[1])
    z2 = lax.conv_general_dilated(spk, model.conv2_w, (1, 1), "VALID",
                                  dimension_numbers=dn)
    z2 = z2 + model.conv2_b[None, :, None, None]
    a2 = jnp.maximum(z2, 0.0).reshape(B, -1)
    g = a2 @ model.lin_w.T
    return jax.nn.softplus(g), hs_new


# ----------------------------------------------------------------------------
if __name__ == "__main__":
    key = jax.random.PRNGKey(0)
    k_model, k_x, k_hs, k_seq = jax.random.split(key, 4)

    B = 2
    img_shape = (4, 16, 16)          # (C, H, W)
    chans = (4, 4)
    ksizes = (7, 5)
    n_units = 5
    dt = 0.01
    T = 8                            # rollout length for the fused time loop

    model = KineticsChannelModelDerivPallas(
        k_model, n_units=n_units, chans=chans, img_shape=img_shape,
        ksizes=ksizes, dt=dt)

    x = jax.random.uniform(k_x, (B,) + img_shape, dtype=jnp.float32)
    hs = jax.random.uniform(k_hs, (B,) + model.h_shapes, dtype=jnp.float32) * 0.1
    hs = hs.at[:, 0].set(1.0 - hs[:, 1:].sum(axis=1))

    # --- single-step forward (matches the PyTorch module's forward) ---
    fwd = jax.jit(model.__call__)
    out, hs_new = fwd(x, hs)
    jax.block_until_ready((out, hs_new))
    assert out.shape == (B, n_units)
    assert hs_new.shape == (B,) + model.h_shapes

    out_ref, hs_ref = _reference_forward(model, x, hs)
    np.testing.assert_allclose(np.asarray(out), np.asarray(out_ref),
                               rtol=2e-2, atol=2e-2)     # bf16-MXU tolerance
    np.testing.assert_allclose(np.asarray(hs_new), np.asarray(hs_ref),
                               rtol=1e-3, atol=1e-3)

    # --- fused weight-resident T-step rollout vs per-step loop ---
    x_seq = jax.random.uniform(k_seq, (T, B) + img_shape, dtype=jnp.float32)
    roll = jax.jit(model.rollout)
    out_seq, hs_T = roll(x_seq, hs)
    jax.block_until_ready((out_seq, hs_T))

    hs_loop = hs
    outs = []
    for t in range(T):
        o_t, hs_loop = fwd(x_seq[t], hs_loop)
        outs.append(o_t)
    out_loop = jnp.stack(outs, axis=0)
    np.testing.assert_allclose(np.asarray(out_seq), np.asarray(out_loop),
                               rtol=1e-4, atol=1e-4)
    np.testing.assert_allclose(np.asarray(hs_T), np.asarray(hs_loop),
                               rtol=1e-4, atol=1e-4)

    assert bool(jnp.all(jnp.isfinite(out_seq))) and bool(jnp.all(jnp.isfinite(hs_T)))
    print("KERNEL_OK")
</pallas_src>

<mosaic_0001>
module attributes {stable_mosaic.version = 11 : i64} {
  func.func @_single_step_kernel(%arg0: memref<2x1024xbf16, #tpu.memory_space<vmem>>, %arg1: memref<8x512xf32, #tpu.memory_space<vmem>>, %arg2: memref<1024x512xbf16, #tpu.memory_space<vmem>>, %arg3: memref<1x512xf32, #tpu.memory_space<vmem>>, %arg4: memref<8x512xf32, #tpu.memory_space<vmem>>, %arg5: memref<512x256xbf16, #tpu.memory_space<vmem>>, %arg6: memref<1x256xf32, #tpu.memory_space<vmem>>, %arg7: memref<256x5xbf16, #tpu.memory_space<vmem>>, %arg8: memref<2x5xf32, #tpu.memory_space<vmem>>, %arg9: memref<8x512xf32, #tpu.memory_space<vmem>>) attributes {dimension_semantics = [], scalar_prefetch = 0 : i64, scratch_operands = 0 : i64, tpu.core_type = #tpu.core_type<tc>} {
    %c0 = arith.constant 0 : index
    %c0_0 = arith.constant 0 : index
    %0 = vector.load %arg1[%c0, %c0_0] : memref<8x512xf32, #tpu.memory_space<vmem>>, vector<8x512xf32>
    %c0_1 = arith.constant 0 : index
    %c0_2 = arith.constant 0 : index
    %1 = vector.load %arg0[%c0_1, %c0_2] : memref<2x1024xbf16, #tpu.memory_space<vmem>>, vector<2x1024xbf16>
    %2 = vector.extract_strided_slice %0 {offsets = [0, 0], sizes = [2, 512], strides = [1, 1]} : vector<8x512xf32> to vector<2x512xf32>
    %3 = vector.extract_strided_slice %0 {offsets = [2, 0], sizes = [2, 512], strides = [1, 1]} : vector<8x512xf32> to vector<2x512xf32>
    %4 = vector.extract_strided_slice %0 {offsets = [4, 0], sizes = [2, 512], strides = [1, 1]} : vector<8x512xf32> to vector<2x512xf32>
    %5 = vector.extract_strided_slice %0 {offsets = [6, 0], sizes = [2, 512], strides = [1, 1]} : vector<8x512xf32> to vector<2x512xf32>
    %c0_3 = arith.constant 0 : index
    %c0_4 = arith.constant 0 : index
    %6 = vector.load %arg2[%c0_3, %c0_4] : memref<1024x512xbf16, #tpu.memory_space<vmem>>, vector<1024x512xbf16>
    %c0_5 = arith.constant 0 : index
    %c0_6 = arith.constant 0 : index
    %7 = vector.load %arg3[%c0_5, %c0_6] : memref<1x512xf32, #tpu.memory_space<vmem>>, vector<1x512xf32>
    %c0_7 = arith.constant 0 : index
    %c0_8 = arith.constant 0 : index
    %8 = vector.load %arg4[%c0_7, %c0_8] : memref<8x512xf32, #tpu.memory_space<vmem>>, vector<8x512xf32>
    %c0_9 = arith.constant 0 : index
    %c0_10 = arith.constant 0 : index
    %9 = vector.load %arg5[%c0_9, %c0_10] : memref<512x256xbf16, #tpu.memory_space<vmem>>, vector<512x256xbf16>
    %c0_11 = arith.constant 0 : index
    %c0_12 = arith.constant 0 : index
    %10 = vector.load %arg6[%c0_11, %c0_12] : memref<1x256xf32, #tpu.memory_space<vmem>>, vector<1x256xf32>
    %c0_13 = arith.constant 0 : index
    %c0_14 = arith.constant 0 : index
    %11 = vector.load %arg7[%c0_13, %c0_14] : memref<256x5xbf16, #tpu.memory_space<vmem>>, vector<256x5xbf16>
    %cst = arith.constant dense<0.000000e+00> : vector<2x512xf32>
    %12 = tpu.matmul %1, %6, %cst {dimension_numbers = #tpu.dot_dimension_numbers<[1], [0], [0], [1], [0, 0, 1, 1], [], []>} : vector<2x1024xbf16>, vector<1024x512xbf16>, vector<2x512xf32> -> vector<2x512xf32>
    %13 = vector.broadcast %7 : vector<1x512xf32> to vector<2x512xf32>
    %14 = arith.addf %12, %13 : vector<2x512xf32>
    %cst_15 = arith.constant 0.000000e+00 : f32
    %15 = vector.broadcast %cst_15 : f32 to vector<2x512xf32>
    %16 = arith.subf %15, %14 : vector<2x512xf32>
    %17 = math.exp %16 : vector<2x512xf32>
    %cst_16 = arith.constant 1.000000e+00 : f32
    %18 = vector.broadcast %cst_16 : f32 to vector<2x512xf32>
    %19 = arith.addf %18, %17 : vector<2x512xf32>
    %20 = tpu.reciprocal %19 {approx = true} : vector<2x512xf32> -> vector<2x512xf32>
    %21 = vector.extract_strided_slice %8 {offsets = [0, 0], sizes = [1, 512], strides = [1, 1]} : vector<8x512xf32> to vector<1x512xf32>
    %22 = vector.extract_strided_slice %8 {offsets = [1, 0], sizes = [1, 512], strides = [1, 1]} : vector<8x512xf32> to vector<1x512xf32>
    %23 = vector.extract_strided_slice %8 {offsets = [2, 0], sizes = [1, 512], strides = [1, 1]} : vector<8x512xf32> to vector<1x512xf32>
    %24 = vector.extract_strided_slice %8 {offsets = [3, 0], sizes = [1, 512], strides = [1, 1]} : vector<8x512xf32> to vector<1x512xf32>
    %25 = vector.extract_strided_slice %8 {offsets = [4, 0], sizes = [1, 512], strides = [1, 1]} : vector<8x512xf32> to vector<1x512xf32>
    %26 = vector.extract_strided_slice %8 {offsets = [5, 0], sizes = [1, 512], strides = [1, 1]} : vector<8x512xf32> to vector<1x512xf32>
    %27 = vector.extract_strided_slice %8 {offsets = [6, 0], sizes = [1, 512], strides = [1, 1]} : vector<8x512xf32> to vector<1x512xf32>
    %28 = vector.extract_strided_slice %8 {offsets = [7, 0], sizes = [1, 512], strides = [1, 1]} : vector<8x512xf32> to vector<1x512xf32>
    %29 = vector.broadcast %21 : vector<1x512xf32> to vector<2x512xf32>
    %30 = arith.mulf %29, %20 : vector<2x512xf32>
    %31 = arith.mulf %30, %2 : vector<2x512xf32>
    %32 = vector.broadcast %22 : vector<1x512xf32> to vector<2x512xf32>
    %33 = arith.mulf %32, %3 : vector<2x512xf32>
    %34 = vector.broadcast %23 : vector<1x512xf32> to vector<2x512xf32>
    %35 = arith.mulf %34, %4 : vector<2x512xf32>
    %36 = vector.broadcast %24 : vector<1x512xf32> to vector<2x512xf32>
    %37 = arith.mulf %36, %4 : vector<2x512xf32>
    %38 = vector.broadcast %25 : vector<1x512xf32> to vector<2x512xf32>
    %39 = arith.mulf %38, %5 : vector<2x512xf32>
    %40 = arith.subf %31, %33 : vector<2x512xf32>
    %41 = arith.subf %2, %31 : vector<2x512xf32>
    %42 = arith.addf %41, %35 : vector<2x512xf32>
    %43 = arith.addf %3, %40 : vector<2x512xf32>
    %44 = arith.addf %4, %33 : vector<2x512xf32>
    %45 = arith.addf %44, %39 : vector<2x512xf32>
    %46 = arith.subf %45, %35 : vector<2x512xf32>
    %47 = arith.subf %46, %37 : vector<2x512xf32>
    %48 = arith.addf %5, %37 : vector<2x512xf32>
    %49 = arith.subf %48, %39 : vector<2x512xf32>
    %50 = vector.broadcast %26 : vector<1x512xf32> to vector<2x512xf32>
    %51 = arith.mulf %50, %43 : vector<2x512xf32>
    %52 = vector.broadcast %27 : vector<1x512xf32> to vector<2x512xf32>
    %53 = arith.mulf %52, %40 : vector<2x512xf32>
    %54 = arith.addf %51, %53 : vector<2x512xf32>
    %55 = vector.broadcast %28 : vector<1x512xf32> to vector<2x512xf32>
    %56 = arith.addf %54, %55 : vector<2x512xf32>
    %cst_17 = arith.constant 0.000000e+00 : f32
    %57 = vector.broadcast %cst_17 : f32 to vector<2x512xf32>
    %58 = arith.maximumf %56, %57 : vector<2x512xf32>
    %59 = arith.truncf %58 : vector<2x512xf32> to vector<2x512xbf16>
    %cst_18 = arith.constant dense<0.000000e+00> : vector<2x256xf32>
    %60 = tpu.matmul %59, %9, %cst_18 {dimension_numbers = #tpu.dot_dimension_numbers<[1], [0], [0], [1], [0, 0, 1, 1], [], []>} : vector<2x512xbf16>, vector<512x256xbf16>, vector<2x256xf32> -> vector<2x256xf32>
    %61 = vector.broadcast %10 : vector<1x256xf32> to vector<2x256xf32>
    %62 = arith.addf %60, %61 : vector<2x256xf32>
    %cst_19 = arith.constant 0.000000e+00 : f32
    %63 = vector.broadcast %cst_19 : f32 to vector<2x256xf32>
    %64 = arith.maximumf %62, %63 : vector<2x256xf32>
    %65 = arith.truncf %64 : vector<2x256xf32> to vector<2x256xbf16>
    %cst_20 = arith.constant dense<0.000000e+00> : vector<2x5xf32>
    %66 = tpu.matmul %65, %11, %cst_20 {dimension_numbers = #tpu.dot_dimension_numbers<[1], [0], [0], [1], [0, 0, 1, 1], [], []>} : vector<2x256xbf16>, vector<256x5xbf16>, vector<2x5xf32> -> vector<2x5xf32>
    %cst_21 = arith.constant 0.000000e+00 : f32
    %67 = vector.broadcast %cst_21 : f32 to vector<2x5xf32>
    %68 = arith.maximumf %66, %67 : vector<2x5xf32>
    %69 = vector.broadcast %cst_21 : f32 to vector<2x5xf32>
    %70 = arith.subf %66, %69 : vector<2x5xf32>
    %71 = arith.cmpf one, %70, %70 : vector<2x5xf32>
    %72 = vector.broadcast %cst_21 : f32 to vector<2x5xf32>
    %73 = arith.addf %66, %72 : vector<2x5xf32>
    %74 = math.absf %70 : vector<2x5xf32>
    %cst_22 = arith.constant 0.000000e+00 : f32
    %75 = vector.broadcast %cst_22 : f32 to vector<2x5xf32>
    %76 = arith.subf %75, %74 : vector<2x5xf32>
    %77 = math.exp %76 : vector<2x5xf32>
    %78 = math.log1p %77 : vector<2x5xf32>
    %79 = arith.addf %68, %78 : vector<2x5xf32>
    %80 = arith.select %71, %73, %79 : vector<2x5xi1>, vector<2x5xf32>
    %c0_23 = arith.constant 0 : index
    %c0_24 = arith.constant 0 : index
    %81 = vector.load %arg9[%c0_23, %c0_24] : memref<8x512xf32, #tpu.memory_space<vmem>>, vector<2x512xf32>
    tpu.vector_store %arg9[%c0_23, %c0_24], %42 {strides = array<i32>} : memref<8x512xf32, #tpu.memory_space<vmem>>, vector<2x512xf32>,
    %c2 = arith.constant 2 : index
    %c0_25 = arith.constant 0 : index
    %82 = vector.load %arg9[%c2, %c0_25] : memref<8x512xf32, #tpu.memory_space<vmem>>, vector<2x512xf32>
    tpu.vector_store %arg9[%c2, %c0_25], %43 {strides = array<i32>} : memref<8x512xf32, #tpu.memory_space<vmem>>, vector<2x512xf32>,
    %c4 = arith.constant 4 : index
    %c0_26 = arith.constant 0 : index
    %83 = vector.load %arg9[%c4, %c0_26] : memref<8x512xf32, #tpu.memory_space<vmem>>, vector<2x512xf32>
    tpu.vector_store %arg9[%c4, %c0_26], %47 {strides = array<i32>} : memref<8x512xf32, #tpu.memory_space<vmem>>, vector<2x512xf32>,
    %c6 = arith.constant 6 : index
    %c0_27 = arith.constant 0 : index
    %84 = vector.load %arg9[%c6, %c0_27] : memref<8x512xf32, #tpu.memory_space<vmem>>, vector<2x512xf32>
    tpu.vector_store %arg9[%c6, %c0_27], %49 {strides = array<i32>} : memref<8x512xf32, #tpu.memory_space<vmem>>, vector<2x512xf32>,
    %c0_28 = arith.constant 0 : index
    %c0_29 = arith.constant 0 : index
    %85 = vector.load %arg8[%c0_28, %c0_29] : memref<2x5xf32, #tpu.memory_space<vmem>>, vector<2x5xf32>
    tpu.vector_store %arg8[%c0_28, %c0_29], %80 {strides = array<i32>} : memref<2x5xf32, #tpu.memory_space<vmem>>, vector<2x5xf32>,
    return
  }
}

</mosaic_0001>

<llo_original>
// kernel: a_call__.1
$region0: #{a_call__.1}
  #allocation0 [shape = 'u32[]', space=smem, size = 0x4, offset = 0x4, fixed_abs, tag = 'smem constant byte address 0x4 - core index']
  #allocation1 [shape = 'u32[144,128]{1,0:T(1,128)}', space=vmem, size = 0x12000, scoped, tag = 'internal scratch']
  %s0 = inlined_call_operand.vmem [shape: bf16[2,1024], index: 0, kind: input, shape index: {}]
  %s1 = inlined_call_operand.vmem [shape: f32[8,512], index: 1, kind: input, shape index: {}, may-alias: {1,9}]
  %s2 = inlined_call_operand.hbm [shape: bf16[1024,512], index: 2, kind: input, shape index: {}]
  %s3 = inlined_call_operand.vmem [shape: f32[1,512], index: 3, kind: input, shape index: {}]
  %s4 = inlined_call_operand.vmem [shape: f32[8,512], index: 4, kind: input, shape index: {}]
  %s5 = inlined_call_operand.hbm [shape: bf16[512,256], index: 5, kind: input, shape index: {}]
  %s6 = inlined_call_operand.vmem [shape: f32[1,256], index: 6, kind: input, shape index: {}]
  %s7 = inlined_call_operand.vmem [shape: bf16[256,5], index: 7, kind: input, shape index: {}]
  %s8 = inlined_call_operand.hbm [shape: f32[2,5], index: 8, kind: output, shape index: {0}]
  %s9 = inlined_call_operand.vmem [shape: f32[8,512], index: 9, kind: output, shape index: {1}, may-alias: {1,9}]
  %10 = xla_tuple %s8, %s9
  %s11 = sld [smem:[#allocation0]]
  $region58: #{a_call__.1} parent=0
    _
  %s13 = ssub.s32 1, %s11
  %s14 = scalar_select 0, %s13, %s11
  $region1: #{a_call__.1} parent=0
    #allocation2 [shape = 'u8[1048576]{0}', space=vmem, size = 0x100000, scoped, tag = 'input window, operand 2, single buffered']
    #allocation3 [shape = 's32[1]{0}', space=sflag, size = 0x4, scoped, tag = 'scoped memory for a_call__.1']
    #allocation4 [shape = 's32[1]{0}', space=sflag, size = 0x4, scoped, tag = 'scoped memory for a_call__.1']
    #allocation5 [shape = 'u8[262144]{0}', space=vmem, size = 0x40000, scoped, tag = 'input window, operand 5, single buffered']
    #allocation6 [shape = 's32[1]{0}', space=sflag, size = 0x4, scoped, tag = 'scoped memory for a_call__.1']
    #allocation7 [shape = 'u8[1024]{0}', space=vmem, size = 0x400, scoped, tag = 'output window, operand 0, single buffered']
    %15 = vsyncpa [#allocation3], 0
    %16 = vsyncpa [#allocation6], 0
    %17 = vsyncpa [#allocation4], 0
    // Predicated region
    $region2: #{a_call__.1} parent=1 // pred_check
      _
    $region3: #{a_call__.1} parent=1 // pred_check_branch
      %19 = sbr.rel (0) target = $region5
    $region4: #{a_call__.1} parent=1 // pred_region
      _
    $region5: #{a_call__.1} parent=1 // pred_fallthru
      _
    // Predicated region
    $region6: #{a_call__.1} parent=1 // pred_check
      _
    $region7: #{a_call__.1} parent=1 // pred_check_branch
      %21 = sbr.rel (0) target = $region9
    $region8: #{a_call__.1} parent=1 // pred_region
      _
    $region9: #{a_call__.1} parent=1 // pred_fallthru
      _
    // Predicated region
    $region10: #{a_call__.1} parent=1 // pred_check
      _
    $region11: #{a_call__.1} parent=1 // pred_check_branch
      %23 = sbr.rel (0) target = $region13
    $region12: #{a_call__.1} parent=1 // pred_region
      %s25 = ssub.s32 32768, 32768
      %26 = vsyncadd [#allocation3], %s25
      %s27 = sshll.u32 [#allocation2], 4
      %s28 = int_to_ptr.vmem [resolvable:$true] %s27
      %33 = dma.hbm_to_vmem [thread:$0]  %s2, 32768, %s28, [#allocation3], 256, 256, 16
    $region13: #{a_call__.1} parent=1 // pred_fallthru
      _
    // Predicated region
    $region14: #{a_call__.1} parent=1 // pred_check
      _
    $region15: #{a_call__.1} parent=1 // pred_check_branch
      %35 = sbr.rel (0) target = $region17
    $region16: #{a_call__.1} parent=1 // pred_region
      _
    $region17: #{a_call__.1} parent=1 // pred_fallthru
      _
    // Predicated region
    $region18: #{a_call__.1} parent=1 // pred_check
      _
    $region19: #{a_call__.1} parent=1 // pred_check_branch
      %37 = sbr.rel (0) target = $region21
    $region20: #{a_call__.1} parent=1 // pred_region
      _
    $region21: #{a_call__.1} parent=1 // pred_fallthru
      _
    // Predicated region
    $region22: #{a_call__.1} parent=1 // pred_check
      _
    $region23: #{a_call__.1} parent=1 // pred_check_branch
      %39 = sbr.rel (0) target = $region25
    $region24: #{a_call__.1} parent=1 // pred_region
      %s41 = ssub.s32 8192, 8192
      %42 = vsyncadd [#allocation6], %s41
      %s43 = sshll.u32 [#allocation5], 4
      %s44 = int_to_ptr.vmem [resolvable:$true] %s43
      %49 = dma.hbm_to_vmem [thread:$0]  %s5, 8192, %s44, [#allocation6], 128, 128, 8
    $region25: #{a_call__.1} parent=1 // pred_fallthru
      _
    // Predicated region
    $region26: #{a_call__.1} parent=1 // pred_check
      _
    $region27: #{a_call__.1} parent=1 // pred_check_branch
      %51 = sbr.rel (0) target = $region29
    $region28: #{a_call__.1} parent=1 // pred_region
      _
    $region29: #{a_call__.1} parent=1 // pred_fallthru
      _
    // Predicated region
    $region30: #{a_call__.1} parent=1 // pred_check
      _
    $region31: #{a_call__.1} parent=1 // pred_check_branch
      %53 = sbr.rel (0) target = $region33
    $region32: #{a_call__.1} parent=1 // pred_region
      _
    $region33: #{a_call__.1} parent=1 // pred_fallthru
      _
    // Predicated region
    $region34: #{a_call__.1} parent=1 // pred_check
      _
    $region35: #{a_call__.1} parent=1 // pred_check_branch
      %55 = sbr.rel (0) target = $region37
    $region36: #{a_call__.1} parent=1 // pred_region
      %56 = dma.done [#allocation3], 32768
    $region37: #{a_call__.1} parent=1 // pred_fallthru
      _
    // Predicated region
    $region38: #{a_call__.1} parent=1 // pred_check
      _
    $region39: #{a_call__.1} parent=1 // pred_check_branch
      %58 = sbr.rel (0) target = $region41
    $region40: #{a_call__.1} parent=1 // pred_region
      %59 = dma.done [#allocation6], 8192
    $region41: #{a_call__.1} parent=1 // pred_fallthru
      _
    %v61 = vld [vmem:[%s1] sm:$0xff]
    %v62 = vld [vmem:[%s1 + $0x8] sm:$0xff]
    %v63 = vld [vmem:[%s1 + $0x10] sm:$0xff]
    %v64 = vld [vmem:[%s1 + $0x18] sm:$0xff]
    %v65 = vld [vmem:[%s0] sm:$0xff]
    %v66 = vld [vmem:[#allocation2] sm:$0xff]
    %v67 = vld [vmem:[#allocation2 + $0x8] sm:$0xff]
    %v68 = vld [vmem:[#allocation2 + $0x10] sm:$0xff]
    %v69 = vld [vmem:[#allocation2 + $0x18] sm:$0xff]
    %v70 = vld [vmem:[#allocation2 + $0x20] sm:$0xff]
    %v71 = vld [vmem:[#allocation2 + $0x28] sm:$0xff]
    %v72 = vld [vmem:[#allocation2 + $0x30] sm:$0xff]
    %v73 = vld [vmem:[#allocation2 + $0x38] sm:$0xff]
    %v74 = vld [vmem:[#allocation2 + $0x40] sm:$0xff]
    %v75 = vld [vmem:[#allocation2 + $0x48] sm:$0xff]
    %v76 = vld [vmem:[#allocation2 + $0x50] sm:$0xff]
    %v77 = vld [vmem:[#allocation2 + $0x58] sm:$0xff]
    %v78 = vld [vmem:[#allocation2 + $0x60] sm:$0xff]
    %v79 = vld [vmem:[#allocation2 + $0x68] sm:$0xff]
    %v80 = vld [vmem:[#allocation2 + $0x70] sm:$0xff]
    %v81 = vld [vmem:[#allocation2 + $0x78] sm:$0xff]
    %v82 = vld [vmem:[#allocation2 + $0x80] sm:$0xff]
    %v83 = vld [vmem:[#allocation2 + $0x88] sm:$0xff]
    %v84 = vld [vmem:[#allocation2 + $0x90] sm:$0xff]
    %v85 = vld [vmem:[#allocation2 + $0x98] sm:$0xff]
    %v86 = vld [vmem:[#allocation2 + $0xa0] sm:$0xff]
    %v87 = vld [vmem:[#allocation2 + $0xa8] sm:$0xff]
    %v88 = vld [vmem:[#allocation2 + $0xb0] sm:$0xff]
    %v89 = vld [vmem:[#allocation2 + $0xb8] sm:$0xff]
    %v90 = vld [vmem:[#allocation2 + $0xc0] sm:$0xff]
    %v91 = vld [vmem:[#allocation2 + $0xc8] sm:$0xff]
    %v92 = vld [vmem:[#allocation2 + $0xd0] sm:$0xff]
    %v93 = vld [vmem:[#allocation2 + $0xd8] sm:$0xff]
    %v94 = vld [vmem:[#allocation2 + $0xe0] sm:$0xff]
    %v95 = vld [vmem:[#allocation2 + $0xe8] sm:$0xff]
    %v96 = vld [vmem:[#allocation2 + $0xf0] sm:$0xff]
    %v97 = vld [vmem:[#allocation2 + $0xf8] sm:$0xff]
    %v98 = vld [vmem:[#allocation2 + $0x100] sm:$0xff]
    %v99 = vld [vmem:[#allocation2 + $0x108] sm:$0xff]
    %v100 = vld [vmem:[#allocation2 + $0x110] sm:$0xff]
    %v101 = vld [vmem:[#allocation2 + $0x118] sm:$0xff]
    %v102 = vld [vmem:[#allocation2 + $0x120] sm:$0xff]
    %v103 = vld [vmem:[#allocation2 + $0x128] sm:$0xff]
    %v104 = vld [vmem:[#allocation2 + $0x130] sm:$0xff]
    %v105 = vld [vmem:[#allocation2 + $0x138] sm:$0xff]
    %v106 = vld [vmem:[#allocation2 + $0x140] sm:$0xff]
    %v107 = vld [vmem:[#allocation2 + $0x148] sm:$0xff]
    %v108 = vld [vmem:[#allocation2 + $0x150] sm:$0xff]
    %v109 = vld [vmem:[#allocation2 + $0x158] sm:$0xff]
    %v110 = vld [vmem:[#allocation2 + $0x160] sm:$0xff]
    %v111 = vld [vmem:[#allocation2 + $0x168] sm:$0xff]
    %v112 = vld [vmem:[#allocation2 + $0x170] sm:$0xff]
    %v113 = vld [vmem:[#allocation2 + $0x178] sm:$0xff]
    %v114 = vld [vmem:[#allocation2 + $0x180] sm:$0xff]
    %v115 = vld [vmem:[#allocation2 + $0x188] sm:$0xff]
    %v116 = vld [vmem:[#allocation2 + $0x190] sm:$0xff]
    %v117 = vld [vmem:[#allocation2 + $0x198] sm:$0xff]
    %v118 = vld [vmem:[#allocation2 + $0x1a0] sm:$0xff]
    %v119 = vld [vmem:[#allocation2 + $0x1a8] sm:$0xff]
    %v120 = vld [vmem:[#allocation2 + $0x1b0] sm:$0xff]
    %v121 = vld [vmem:[#allocation2 + $0x1b8] sm:$0xff]
    %v122 = vld [vmem:[#allocation2 + $0x1c0] sm:$0xff]
    %v123 = vld [vmem:[#allocation2 + $0x1c8] sm:$0xff]
    %v124 = vld [vmem:[#allocation2 + $0x1d0] sm:$0xff]
    %v125 = vld [vmem:[#allocation2 + $0x1d8] sm:$0xff]
    %v126 = vld [vmem:[#allocation2 + $0x1e0] sm:$0xff]
    %v127 = vld [vmem:[#allocation2 + $0x1e8] sm:$0xff]
    %v128 = vld [vmem:[#allocation2 + $0x1f0] sm:$0xff]
    %v129 = vld [vmem:[#allocation2 + $0x1f8] sm:$0xff]
    %v130 = vld [vmem:[#allocation2 + $0x200] sm:$0xff]
    %v131 = vld [vmem:[#allocation2 + $0x208] sm:$0xff]
    %v132 = vld [vmem:[#allocation2 + $0x210] sm:$0xff]
    %v133 = vld [vmem:[#allocation2 + $0x218] sm:$0xff]
    %v134 = vld [vmem:[#allocation2 + $0x220] sm:$0xff]
    %v135 = vld [vmem:[#allocation2 + $0x228] sm:$0xff]
    %v136 = vld [vmem:[#allocation2 + $0x230] sm:$0xff]
    %v137 = vld [vmem:[#allocation2 + $0x238] sm:$0xff]
    %v138 = vld [vmem:[#allocation2 + $0x240] sm:$0xff]
    %v139 = vld [vmem:[#allocation2 + $0x248] sm:$0xff]
    %v140 = vld [vmem:[#allocation2 + $0x250] sm:$0xff]
    %v141 = vld [vmem:[#allocation2 + $0x258] sm:$0xff]
    %v142 = vld [vmem:[#allocation2 + $0x260] sm:$0xff]
    %v143 = vld [vmem:[#allocation2 + $0x268] sm:$0xff]
    %v144 = vld [vmem:[#allocation2 + $0x270] sm:$0xff]
    %v145 = vld [vmem:[#allocation2 + $0x278] sm:$0xff]
    %v146 = vld [vmem:[#allocation2 + $0x280] sm:$0xff]
    %v147 = vld [vmem:[#allocation2 + $0x288] sm:$0xff]
    %v148 = vld [vmem:[#allocation2 + $0x290] sm:$0xff]
    %v149 = vld [vmem:[#allocation2 + $0x298] sm:$0xff]
    %v150 = vld [vmem:[#allocation2 + $0x2a0] sm:$0xff]
    %v151 = vld [vmem:[#allocation2 + $0x2a8] sm:$0xff]
    %v152 = vld [vmem:[#allocation2 + $0x2b0] sm:$0xff]
    %v153 = vld [vmem:[#allocation2 + $0x2b8] sm:$0xff]
    %v154 = vld [vmem:[#allocation2 + $0x2c0] sm:$0xff]
    %v155 = vld [vmem:[#allocation2 + $0x2c8] sm:$0xff]
    %v156 = vld [vmem:[#allocation2 + $0x2d0] sm:$0xff]
    %v157 = vld [vmem:[#allocation2 + $0x2d8] sm:$0xff]
    %v158 = vld [vmem:[#allocation2 + $0x2e0] sm:$0xff]
    %v159 = vld [vmem:[#allocation2 + $0x2e8] sm:$0xff]
    %v160 = vld [vmem:[#allocation2 + $0x2f0] sm:$0xff]
    %v161 = vld [vmem:[#allocation2 + $0x2f8] sm:$0xff]
    %v162 = vld [vmem:[#allocation2 + $0x300] sm:$0xff]
    %v163 = vld [vmem:[#allocation2 + $0x308] sm:$0xff]
    %v164 = vld [vmem:[#allocation2 + $0x310] sm:$0xff]
    %v165 = vld [vmem:[#allocation2 + $0x318] sm:$0xff]
    %v166 = vld [vmem:[#allocation2 + $0x320] sm:$0xff]
    %v167 = vld [vmem:[#allocation2 + $0x328] sm:$0xff]
    %v168 = vld [vmem:[#allocation2 + $0x330] sm:$0xff]
    %v169 = vld [vmem:[#allocation2 + $0x338] sm:$0xff]
    %v170 = vld [vmem:[#allocation2 + $0x340] sm:$0xff]
    %v171 = vld [vmem:[#allocation2 + $0x348] sm:$0xff]
    %v172 = vld [vmem:[#allocation2 + $0x350] sm:$0xff]
    %v173 = vld [vmem:[#allocation2 + $0x358] sm:$0xff]
    %v174 = vld [vmem:[#allocation2 + $0x360] sm:$0xff]
    %v175 = vld [vmem:[#allocation2 + $0x368] sm:$0xff]
    %v176 = vld [vmem:[#allocation2 + $0x370] sm:$0xff]
    %v177 = vld [vmem:[#allocation2 + $0x378] sm:$0xff]
    %v178 = vld [vmem:[#allocation2 + $0x380] sm:$0xff]
    %v179 = vld [vmem:[#allocation2 + $0x388] sm:$0xff]
    %v180 = vld [vmem:[#allocation2 + $0x390] sm:$0xff]
    %v181 = vld [vmem:[#allocation2 + $0x398] sm:$0xff]
    %v182 = vld [vmem:[#allocation2 + $0x3a0] sm:$0xff]
    %v183 = vld [vmem:[#allocation2 + $0x3a8] sm:$0xff]
    %v184 = vld [vmem:[#allocation2 + $0x3b0] sm:$0xff]
    %v185 = vld [vmem:[#allocation2 + $0x3b8] sm:$0xff]
    %v186 = vld [vmem:[#allocation2 + $0x3c0] sm:$0xff]
    %v187 = vld [vmem:[#allocation2 + $0x3c8] sm:$0xff]
    %v188 = vld [vmem:[#allocation2 + $0x3d0] sm:$0xff]
    %v189 = vld [vmem:[#allocation2 + $0x3d8] sm:$0xff]
    %v190 = vld [vmem:[#allocation2 + $0x3e0] sm:$0xff]
    %v191 = vld [vmem:[#allocation2 + $0x3e8] sm:$0xff]
    %v192 = vld [vmem:[#allocation2 + $0x3f0] sm:$0xff]
    %v193 = vld [vmem:[#allocation2 + $0x3f8] sm:$0xff]
    %v194 = vld [vmem:[#allocation2 + $0x400] sm:$0xff]
    %v195 = vld [vmem:[#allocation2 + $0x408] sm:$0xff]
    %v196 = vld [vmem:[#allocation2 + $0x410] sm:$0xff]
    %v197 = vld [vmem:[#allocation2 + $0x418] sm:$0xff]
    %v198 = vld [vmem:[#allocation2 + $0x420] sm:$0xff]
    %v199 = vld [vmem:[#allocation2 + $0x428] sm:$0xff]
    %v200 = vld [vmem:[#allocation2 + $0x430] sm:$0xff]
    %v201 = vld [vmem:[#allocation2 + $0x438] sm:$0xff]
    %v202 = vld [vmem:[#allocation2 + $0x440] sm:$0xff]
    %v203 = vld [vmem:[#allocation2 + $0x448] sm:$0xff]
    %v204 = vld [vmem:[#allocation2 + $0x450] sm:$0xff]
    %v205 = vld [vmem:[#allocation2 + $0x458] sm:$0xff]
    %v206 = vld [vmem:[#allocation2 + $0x460] sm:$0xff]
    %v207 = vld [vmem:[#allocation2 + $0x468] sm:$0xff]
    %v208 = vld [vmem:[#allocation2 + $0x470] sm:$0xff]
    %v209 = vld [vmem:[#allocation2 + $0x478] sm:$0xff]
    %v210 = vld [vmem:[#allocation2 + $0x480] sm:$0xff]
    %v211 = vld [vmem:[#allocation2 + $0x488] sm:$0xff]
    %v212 = vld [vmem:[#allocation2 + $0x490] sm:$0xff]
    %v213 = vld [vmem:[#allocation2 + $0x498] sm:$0xff]
    %v214 = vld [vmem:[#allocation2 + $0x4a0] sm:$0xff]
    %v215 = vld [vmem:[#allocation2 + $0x4a8] sm:$0xff]
    %v216 = vld [vmem:[#allocation2 + $0x4b0] sm:$0xff]
    %v217 = vld [vmem:[#allocation2 + $0x4b8] sm:$0xff]
    %v218 = vld [vmem:[#allocation2 + $0x4c0] sm:$0xff]
    %v219 = vld [vmem:[#allocation2 + $0x4c8] sm:$0xff]
    %v220 = vld [vmem:[#allocation2 + $0x4d0] sm:$0xff]
    %v221 = vld [vmem:[#allocation2 + $0x4d8] sm:$0xff]
    %v222 = vld [vmem:[#allocation2 + $0x4e0] sm:$0xff]
    %v223 = vld [vmem:[#allocation2 + $0x4e8] sm:$0xff]
    %v224 = vld [vmem:[#allocation2 + $0x4f0] sm:$0xff]
    %v225 = vld [vmem:[#allocation2 + $0x4f8] sm:$0xff]
    %v226 = vld [vmem:[#allocation2 + $0x500] sm:$0xff]
    %v227 = vld [vmem:[#allocation2 + $0x508] sm:$0xff]
    %v228 = vld [vmem:[#allocation2 + $0x510] sm:$0xff]
    %v229 = vld [vmem:[#allocation2 + $0x518] sm:$0xff]
    %v230 = vld [vmem:[#allocation2 + $0x520] sm:$0xff]
    %v231 = vld [vmem:[#allocation2 + $0x528] sm:$0xff]
    %v232 = vld [vmem:[#allocation2 + $0x530] sm:$0xff]
    %v233 = vld [vmem:[#allocation2 + $0x538] sm:$0xff]
    %v234 = vld [vmem:[#allocation2 + $0x540] sm:$0xff]
    %v235 = vld [vmem:[#allocation2 + $0x548] sm:$0xff]
    %v236 = vld [vmem:[#allocation2 + $0x550] sm:$0xff]
    %v237 = vld [vmem:[#allocation2 + $0x558] sm:$0xff]
    %v238 = vld [vmem:[#allocation2 + $0x560] sm:$0xff]
    %v239 = vld [vmem:[#allocation2 + $0x568] sm:$0xff]
    %v240 = vld [vmem:[#allocation2 + $0x570] sm:$0xff]
    %v241 = vld [vmem:[#allocation2 + $0x578] sm:$0xff]
    %v242 = vld [vmem:[#allocation2 + $0x580] sm:$0xff]
    %v243 = vld [vmem:[#allocation2 + $0x588] sm:$0xff]
    %v244 = vld [vmem:[#allocation2 + $0x590] sm:$0xff]
    %v245 = vld [vmem:[#allocation2 + $0x598] sm:$0xff]
    %v246 = vld [vmem:[#allocation2 + $0x5a0] sm:$0xff]
    %v247 = vld [vmem:[#allocation2 + $0x5a8] sm:$0xff]
    %v248 = vld [vmem:[#allocation2 + $0x5b0] sm:$0xff]
    %v249 = vld [vmem:[#allocation2 + $0x5b8] sm:$0xff]
    %v250 = vld [vmem:[#allocation2 + $0x5c0] sm:$0xff]
    %v251 = vld [vmem:[#allocation2 + $0x5c8] sm:$0xff]
    %v252 = vld [vmem:[#allocation2 + $0x5d0] sm:$0xff]
    %v253 = vld [vmem:[#allocation2 + $0x5d8] sm:$0xff]
    %v254 = vld [vmem:[#allocation2 + $0x5e0] sm:$0xff]
    %v255 = vld [vmem:[#allocation2 + $0x5e8] sm:$0xff]
    %v256 = vld [vmem:[#allocation2 + $0x5f0] sm:$0xff]
    %v257 = vld [vmem:[#allocation2 + $0x5f8] sm:$0xff]
    %v258 = vld [vmem:[#allocation2 + $0x600] sm:$0xff]
    %v259 = vld [vmem:[#allocation2 + $0x608] sm:$0xff]
    %v260 = vld [vmem:[#allocation2 + $0x610] sm:$0xff]
    %v261 = vld [vmem:[#allocation2 + $0x618] sm:$0xff]
    %v262 = vld [vmem:[#allocation2 + $0x620] sm:$0xff]
    %v263 = vld [vmem:[#allocation2 + $0x628] sm:$0xff]
    %v264 = vld [vmem:[#allocation2 + $0x630] sm:$0xff]
    %v265 = vld [vmem:[#allocation2 + $0x638] sm:$0xff]
    %v266 = vld [vmem:[#allocation2 + $0x640] sm:$0xff]
    %v267 = vld [vmem:[#allocation2 + $0x648] sm:$0xff]
    %v268 = vld [vmem:[#allocation2 + $0x650] sm:$0xff]
    %v269 = vld [vmem:[#allocation2 + $0x658] sm:$0xff]
    %v270 = vld [vmem:[#allocation2 + $0x660] sm:$0xff]
    %v271 = vld [vmem:[#allocation2 + $0x668] sm:$0xff]
    %v272 = vld [vmem:[#allocation2 + $0x670] sm:$0xff]
    %v273 = vld [vmem:[#allocation2 + $0x678] sm:$0xff]
    %v274 = vld [vmem:[#allocation2 + $0x680] sm:$0xff]
    %v275 = vld [vmem:[#allocation2 + $0x688] sm:$0xff]
    %v276 = vld [vmem:[#allocation2 + $0x690] sm:$0xff]
    %v277 = vld [vmem:[#allocation2 + $0x698] sm:$0xff]
    %v278 = vld [vmem:[#allocation2 + $0x6a0] sm:$0xff]
    %v279 = vld [vmem:[#allocation2 + $0x6a8] sm:$0xff]
    %v280 = vld [vmem:[#allocation2 + $0x6b0] sm:$0xff]
    %v281 = vld [vmem:[#allocation2 + $0x6b8] sm:$0xff]
    %v282 = vld [vmem:[#allocation2 + $0x6c0] sm:$0xff]
    %v283 = vld [vmem:[#allocation2 + $0x6c8] sm:$0xff]
    %v284 = vld [vmem:[#allocation2 + $0x6d0] sm:$0xff]
    %v285 = vld [vmem:[#allocation2 + $0x6d8] sm:$0xff]
    %v286 = vld [vmem:[#allocation2 + $0x6e0] sm:$0xff]
    %v287 = vld [vmem:[#allocation2 + $0x6e8] sm:$0xff]
    %v288 = vld [vmem:[#allocation2 + $0x6f0] sm:$0xff]
    %v289 = vld [vmem:[#allocation2 + $0x6f8] sm:$0xff]
    %v290 = vld [vmem:[#allocation2 + $0x700] sm:$0xff]
    %v291 = vld [vmem:[#allocation2 + $0x708] sm:$0xff]
    %v292 = vld [vmem:[#allocation2 + $0x710] sm:$0xff]
    %v293 = vld [vmem:[#allocation2 + $0x718] sm:$0xff]
    %v294 = vld [vmem:[#allocation2 + $0x720] sm:$0xff]
    %v295 = vld [vmem:[#allocation2 + $0x728] sm:$0xff]
    %v296 = vld [vmem:[#allocation2 + $0x730] sm:$0xff]
    %v297 = vld [vmem:[#allocation2 + $0x738] sm:$0xff]
    %v298 = vld [vmem:[#allocation2 + $0x740] sm:$0xff]
    %v299 = vld [vmem:[#allocation2 + $0x748] sm:$0xff]
    %v300 = vld [vmem:[#allocation2 + $0x750] sm:$0xff]
    %v301 = vld [vmem:[#allocation2 + $0x758] sm:$0xff]
    %v302 = vld [vmem:[#allocation2 + $0x760] sm:$0xff]
    %v303 = vld [vmem:[#allocation2 + $0x768] sm:$0xff]
    %v304 = vld [vmem:[#allocation2 + $0x770] sm:$0xff]
    %v305 = vld [vmem:[#allocation2 + $0x778] sm:$0xff]
    %v306 = vld [vmem:[#allocation2 + $0x780] sm:$0xff]
    %v307 = vld [vmem:[#allocation2 + $0x788] sm:$0xff]
    %v308 = vld [vmem:[#allocation2 + $0x790] sm:$0xff]
    %v309 = vld [vmem:[#allocation2 + $0x798] sm:$0xff]
    %v310 = vld [vmem:[#allocation2 + $0x7a0] sm:$0xff]
    %v311 = vld [vmem:[#allocation2 + $0x7a8] sm:$0xff]
    %v312 = vld [vmem:[#allocation2 + $0x7b0] sm:$0xff]
    %v313 = vld [vmem:[#allocation2 + $0x7b8] sm:$0xff]
    %v314 = vld [vmem:[#allocation2 + $0x7c0] sm:$0xff]
    %v315 = vld [vmem:[#allocation2 + $0x7c8] sm:$0xff]
    %v316 = vld [vmem:[#allocation2 + $0x7d0] sm:$0xff]
    %v317 = vld [vmem:[#allocation2 + $0x7d8] sm:$0xff]
    %v318 = vld [vmem:[#allocation2 + $0x7e0] sm:$0xff]
    %v319 = vld [vmem:[#allocation2 + $0x7e8] sm:$0xff]
    %v320 = vld [vmem:[#allocation2 + $0x7f0] sm:$0xff]
    %v321 = vld [vmem:[#allocation2 + $0x7f8] sm:$0xff]
    %v322 = vld [vmem:[%s3] sm:$0xf]
    %v323 = vld [vmem:[%s4] sm:$0xff]
    %v324 = vld [vmem:[%s4 + $0x8] sm:$0xff]
    %v325 = vld [vmem:[%s4 + $0x10] sm:$0xff]
    %v326 = vld [vmem:[%s4 + $0x18] sm:$0xff]
    %v327 = vld [vmem:[#allocation5] sm:$0xff]
    %v328 = vld [vmem:[#allocation5 + $0x8] sm:$0xff]
    %v329 = vld [vmem:[#allocation5 + $0x10] sm:$0xff]
    %v330 = vld [vmem:[#allocation5 + $0x18] sm:$0xff]
    %v331 = vld [vmem:[#allocation5 + $0x20] sm:$0xff]
    %v332 = vld [vmem:[#allocation5 + $0x28] sm:$0xff]
    %v333 = vld [vmem:[#allocation5 + $0x30] sm:$0xff]
    %v334 = vld [vmem:[#allocation5 + $0x38] sm:$0xff]
    %v335 = vld [vmem:[#allocation5 + $0x40] sm:$0xff]
    %v336 = vld [vmem:[#allocation5 + $0x48] sm:$0xff]
    %v337 = vld [vmem:[#allocation5 + $0x50] sm:$0xff]
    %v338 = vld [vmem:[#allocation5 + $0x58] sm:$0xff]
    %v339 = vld [vmem:[#allocation5 + $0x60] sm:$0xff]
    %v340 = vld [vmem:[#allocation5 + $0x68] sm:$0xff]
    %v341 = vld [vmem:[#allocation5 + $0x70] sm:$0xff]
    %v342 = vld [vmem:[#allocation5 + $0x78] sm:$0xff]
    %v343 = vld [vmem:[#allocation5 + $0x80] sm:$0xff]
    %v344 = vld [vmem:[#allocation5 + $0x88] sm:$0xff]
    %v345 = vld [vmem:[#allocation5 + $0x90] sm:$0xff]
    %v346 = vld [vmem:[#allocation5 + $0x98] sm:$0xff]
    %v347 = vld [vmem:[#allocation5 + $0xa0] sm:$0xff]
    %v348 = vld [vmem:[#allocation5 + $0xa8] sm:$0xff]
    %v349 = vld [vmem:[#allocation5 + $0xb0] sm:$0xff]
    %v350 = vld [vmem:[#allocation5 + $0xb8] sm:$0xff]
    %v351 = vld [vmem:[#allocation5 + $0xc0] sm:$0xff]
    %v352 = vld [vmem:[#allocation5 + $0xc8] sm:$0xff]
    %v353 = vld [vmem:[#allocation5 + $0xd0] sm:$0xff]
    %v354 = vld [vmem:[#allocation5 + $0xd8] sm:$0xff]
    %v355 = vld [vmem:[#allocation5 + $0xe0] sm:$0xff]
    %v356 = vld [vmem:[#allocation5 + $0xe8] sm:$0xff]
    %v357 = vld [vmem:[#allocation5 + $0xf0] sm:$0xff]
    %v358 = vld [vmem:[#allocation5 + $0xf8] sm:$0xff]
    %v359 = vld [vmem:[#allocation5 + $0x100] sm:$0xff]
    %v360 = vld [vmem:[#allocation5 + $0x108] sm:$0xff]
    %v361 = vld [vmem:[#allocation5 + $0x110] sm:$0xff]
    %v362 = vld [vmem:[#allocation5 + $0x118] sm:$0xff]
    %v363 = vld [vmem:[#allocation5 + $0x120] sm:$0xff]
    %v364 = vld [vmem:[#allocation5 + $0x128] sm:$0xff]
    %v365 = vld [vmem:[#allocation5 + $0x130] sm:$0xff]
    %v366 = vld [vmem:[#allocation5 + $0x138] sm:$0xff]
    %v367 = vld [vmem:[#allocation5 + $0x140] sm:$0xff]
    %v368 = vld [vmem:[#allocation5 + $0x148] sm:$0xff]
    %v369 = vld [vmem:[#allocation5 + $0x150] sm:$0xff]
    %v370 = vld [vmem:[#allocation5 + $0x158] sm:$0xff]
    %v371 = vld [vmem:[#allocation5 + $0x160] sm:$0xff]
    %v372 = vld [vmem:[#allocation5 + $0x168] sm:$0xff]
    %v373 = vld [vmem:[#allocation5 + $0x170] sm:$0xff]
    %v374 = vld [vmem:[#allocation5 + $0x178] sm:$0xff]
    %v375 = vld [vmem:[#allocation5 + $0x180] sm:$0xff]
    %v376 = vld [vmem:[#allocation5 + $0x188] sm:$0xff]
    %v377 = vld [vmem:[#allocation5 + $0x190] sm:$0xff]
    %v378 = vld [vmem:[#allocation5 + $0x198] sm:$0xff]
    %v379 = vld [vmem:[#allocation5 + $0x1a0] sm:$0xff]
    %v380 = vld [vmem:[#allocation5 + $0x1a8] sm:$0xff]
    %v381 = vld [vmem:[#allocation5 + $0x1b0] sm:$0xff]
    %v382 = vld [vmem:[#allocation5 + $0x1b8] sm:$0xff]
    %v383 = vld [vmem:[#allocation5 + $0x1c0] sm:$0xff]
    %v384 = vld [vmem:[#allocation5 + $0x1c8] sm:$0xff]
    %v385 = vld [vmem:[#allocation5 + $0x1d0] sm:$0xff]
    %v386 = vld [vmem:[#allocation5 + $0x1d8] sm:$0xff]
    %v387 = vld [vmem:[#allocation5 + $0x1e0] sm:$0xff]
    %v388 = vld [vmem:[#allocation5 + $0x1e8] sm:$0xff]
    %v389 = vld [vmem:[#allocation5 + $0x1f0] sm:$0xff]
    %v390 = vld [vmem:[#allocation5 + $0x1f8] sm:$0xff]
    %v391 = vld [vmem:[%s6] sm:$0x3]
    %v392 = vld [vmem:[%s7] sm:$0xf]
    %v393 = vld [vmem:[%s7 + $0x4] sm:$0xf]
    %v394 = vld [vmem:[%s7 + $0x8] sm:$0xf]
    %v395 = vld [vmem:[%s7 + $0xc] sm:$0xf]
    %v396 = vld [vmem:[%s7 + $0x10] sm:$0xf]
    %v397 = vld [vmem:[%s7 + $0x14] sm:$0xf]
    %v398 = vld [vmem:[%s7 + $0x18] sm:$0xf]
    %v399 = vld [vmem:[%s7 + $0x1c] sm:$0xf]
    %v400 = vld [vmem:[%s7 + $0x20] sm:$0xf]
    %v401 = vld [vmem:[%s7 + $0x24] sm:$0xf]
    %v402 = vld [vmem:[%s7 + $0x28] sm:$0xf]
    %v403 = vld [vmem:[%s7 + $0x2c] sm:$0xf]
    %v404 = vld [vmem:[%s7 + $0x30] sm:$0xf]
    %v405 = vld [vmem:[%s7 + $0x34] sm:$0xf]
    %v406 = vld [vmem:[%s7 + $0x38] sm:$0xf]
    %v407 = vld [vmem:[%s7 + $0x3c] sm:$0xf]
    %v408 = vld [vmem:[%s7 + $0x40] sm:$0xf]
    %v409 = vld [vmem:[%s7 + $0x44] sm:$0xf]
    %v410 = vld [vmem:[%s7 + $0x48] sm:$0xf]
    %v411 = vld [vmem:[%s7 + $0x4c] sm:$0xf]
    %v412 = vld [vmem:[%s7 + $0x50] sm:$0xf]
    %v413 = vld [vmem:[%s7 + $0x54] sm:$0xf]
    %v414 = vld [vmem:[%s7 + $0x58] sm:$0xf]
    %v415 = vld [vmem:[%s7 + $0x5c] sm:$0xf]
    %v416 = vld [vmem:[%s7 + $0x60] sm:$0xf]
    %v417 = vld [vmem:[%s7 + $0x64] sm:$0xf]
    %v418 = vld [vmem:[%s7 + $0x68] sm:$0xf]
    %v419 = vld [vmem:[%s7 + $0x6c] sm:$0xf]
    %v420 = vld [vmem:[%s7 + $0x70] sm:$0xf]
    %v421 = vld [vmem:[%s7 + $0x74] sm:$0xf]
    %v422 = vld [vmem:[%s7 + $0x78] sm:$0xf]
    %v423 = vld [vmem:[%s7 + $0x7c] sm:$0xf]
    %v425 = vlaneseq
    %v426 = vshrl.u32 %v425, 7
    %v427 = vsub.s32 0, %v426
    %v428 = vrot.slane %v322, %v427
    %v429 = vlaneseq
    %v430 = vshrl.u32 %v429, 7
    %v431 = vsub.s32 1, %v430
    %v432 = vrot.slane %v322, %v431
    %v433 = vlaneseq
    %v434 = vshrl.u32 %v433, 7
    %v435 = vsub.s32 2, %v434
    %v436 = vrot.slane %v322, %v435
    %v437 = vlaneseq
    %v438 = vshrl.u32 %v437, 7
    %v439 = vsub.s32 3, %v438
    %v440 = vrot.slane %v322, %v439
    %v446 = vcombine.high %v65, %v65
    %v448 = vunpack.c.l.s4 1966171168
    %v449 = vunpack.c.0.s8 %v448
    %v450 = vlaneseq
    %v451 = vshrl.u32 %v450, 7
    %v452 = vsub.s32 %v449, %v451
    %v453 = vrot.slane %v65, %v452
    %v455 = vunpack.c.l.s4 1966171168
    %v456 = vunpack.c.0.s8 %v455
    %v457 = vlaneseq
    %v458 = vshrl.u32 %v457, 7
    %v459 = vsub.s32 %v456, %v458
    %v460 = vrot.slane %v446, %v459
    %v461 = vcombine.high %v453, %v453
    %v462 = vcombine.high %v460, %v460
    %v464 = vunpack.c.l.s4 1966171168
    %v465 = vunpack.c.0.s8 %v464
    %v466 = vlaneseq
    %v467 = vshrl.u32 %v466, 7
    %v468 = vsub.s32 %v465, %v467
    %v469 = vrot.slane %v453, %v468
    %v471 = vunpack.c.l.s4 1966171168
    %v472 = vunpack.c.0.s8 %v471
    %v473 = vlaneseq
    %v474 = vshrl.u32 %v473, 7
    %v475 = vsub.s32 %v472, %v474
    %v476 = vrot.slane %v460, %v475
    %v478 = vunpack.c.l.s4 1966171168
    %v479 = vunpack.c.0.s8 %v478
    %v480 = vlaneseq
    %v481 = vshrl.u32 %v480, 7
    %v482 = vsub.s32 %v479, %v481
    %v483 = vrot.slane %v461, %v482
    %v485 = vunpack.c.l.s4 1966171168
    %v486 = vunpack.c.0.s8 %v485
    %v487 = vlaneseq
    %v488 = vshrl.u32 %v487, 7
    %v489 = vsub.s32 %v486, %v488
    %v490 = vrot.slane %v462, %v489
    %v491 = vcombine.high %v469, %v469
    %v492 = vcombine.high %v476, %v476
    %v493 = vcombine.high %v483, %v483
    %v494 = vcombine.high %v490, %v490
    %v759 = vunpack.c.l.b16 %v66
    %v760 = vunpack.c.h.b16 %v66
    %v761 = vunpack.c.l.b16 %v67
    %v762 = vunpack.c.h.b16 %v67
    %v763 = vunpack.c.l.b16 %v68
    %v764 = vunpack.c.h.b16 %v68
    %v765 = vunpack.c.l.b16 %v69
    %v766 = vunpack.c.h.b16 %v69
    %v767 = vunpack.c.l.b16 %v70
    %v768 = vunpack.c.h.b16 %v70
    %v769 = vunpack.c.l.b16 %v71
    %v770 = vunpack.c.h.b16 %v71
    %v771 = vunpack.c.l.b16 %v72
    %v772 = vunpack.c.h.b16 %v72
    %v773 = vunpack.c.l.b16 %v73
    %v774 = vunpack.c.h.b16 %v73
    %v775 = vunpack.c.l.b16 %v74
    %v776 = vunpack.c.h.b16 %v74
    %v777 = vunpack.c.l.b16 %v75
    %v778 = vunpack.c.h.b16 %v75
    %v779 = vunpack.c.l.b16 %v76
    %v780 = vunpack.c.h.b16 %v76
    %v781 = vunpack.c.l.b16 %v77
    %v782 = vunpack.c.h.b16 %v77
    %v783 = vunpack.c.l.b16 %v78
    %v784 = vunpack.c.h.b16 %v78
    %v785 = vunpack.c.l.b16 %v79
    %v786 = vunpack.c.h.b16 %v79
    %v787 = vunpack.c.l.b16 %v80
    %v788 = vunpack.c.h.b16 %v80
    %v789 = vunpack.c.l.b16 %v81
    %v790 = vunpack.c.h.b16 %v81
    %v791 = vunpack.c.l.b16 %v82
    %v792 = vunpack.c.h.b16 %v82
    %v793 = vunpack.c.l.b16 %v83
    %v794 = vunpack.c.h.b16 %v83
    %v795 = vunpack.c.l.b16 %v84
    %v796 = vunpack.c.h.b16 %v84
    %v797 = vunpack.c.l.b16 %v85
    %v798 = vunpack.c.h.b16 %v85
    %v799 = vunpack.c.l.b16 %v86
    %v800 = vunpack.c.h.b16 %v86
    %v801 = vunpack.c.l.b16 %v87
    %v802 = vunpack.c.h.b16 %v87
    %v803 = vunpack.c.l.b16 %v88
    %v804 = vunpack.c.h.b16 %v88
    %v805 = vunpack.c.l.b16 %v89
    %v806 = vunpack.c.h.b16 %v89
    %v807 = vunpack.c.l.b16 %v90
    %v808 = vunpack.c.h.b16 %v90
    %v809 = vunpack.c.l.b16 %v91
    %v810 = vunpack.c.h.b16 %v91
    %v811 = vunpack.c.l.b16 %v92
    %v812 = vunpack.c.h.b16 %v92
    %v813 = vunpack.c.l.b16 %v93
    %v814 = vunpack.c.h.b16 %v93
    %v815 = vunpack.c.l.b16 %v94
    %v816 = vunpack.c.h.b16 %v94
    %v817 = vunpack.c.l.b16 %v95
    %v818 = vunpack.c.h.b16 %v95
    %v819 = vunpack.c.l.b16 %v96
    %v820 = vunpack.c.h.b16 %v96
    %v821 = vunpack.c.l.b16 %v97
    %v822 = vunpack.c.h.b16 %v97
    %v823 = vunpack.c.l.b16 %v98
    %v824 = vunpack.c.h.b16 %v98
    %v825 = vunpack.c.l.b16 %v99
    %v826 = vunpack.c.h.b16 %v99
    %v827 = vunpack.c.l.b16 %v100
    %v828 = vunpack.c.h.b16 %v100
    %v829 = vunpack.c.l.b16 %v101
    %v830 = vunpack.c.h.b16 %v101
    %v831 = vunpack.c.l.b16 %v102
    %v832 = vunpack.c.h.b16 %v102
    %v833 = vunpack.c.l.b16 %v103
    %v834 = vunpack.c.h.b16 %v103
    %v835 = vunpack.c.l.b16 %v104
    %v836 = vunpack.c.h.b16 %v104
    %v837 = vunpack.c.l.b16 %v105
    %v838 = vunpack.c.h.b16 %v105
    %v839 = vunpack.c.l.b16 %v106
    %v840 = vunpack.c.h.b16 %v106
    %v841 = vunpack.c.l.b16 %v107
    %v842 = vunpack.c.h.b16 %v107
    %v843 = vunpack.c.l.b16 %v108
    %v844 = vunpack.c.h.b16 %v108
    %v845 = vunpack.c.l.b16 %v109
    %v846 = vunpack.c.h.b16 %v109
    %v847 = vunpack.c.l.b16 %v110
    %v848 = vunpack.c.h.b16 %v110
    %v849 = vunpack.c.l.b16 %v111
    %v850 = vunpack.c.h.b16 %v111
    %v851 = vunpack.c.l.b16 %v112
    %v852 = vunpack.c.h.b16 %v112
    %v853 = vunpack.c.l.b16 %v113
    %v854 = vunpack.c.h.b16 %v113
    %v855 = vunpack.c.l.b16 %v114
    %v856 = vunpack.c.h.b16 %v114
    %v857 = vunpack.c.l.b16 %v115
    %v858 = vunpack.c.h.b16 %v115
    %v859 = vunpack.c.l.b16 %v116
    %v860 = vunpack.c.h.b16 %v116
    %v861 = vunpack.c.l.b16 %v117
    %v862 = vunpack.c.h.b16 %v117
    %v863 = vunpack.c.l.b16 %v118
    %v864 = vunpack.c.h.b16 %v118
    %v865 = vunpack.c.l.b16 %v119
    %v866 = vunpack.c.h.b16 %v119
    %v867 = vunpack.c.l.b16 %v120
    %v868 = vunpack.c.h.b16 %v120
    %v869 = vunpack.c.l.b16 %v121
    %v870 = vunpack.c.h.b16 %v121
    %v871 = vunpack.c.l.b16 %v122
    %v872 = vunpack.c.h.b16 %v122
    %v873 = vunpack.c.l.b16 %v123
    %v874 = vunpack.c.h.b16 %v123
    %v875 = vunpack.c.l.b16 %v124
    %v876 = vunpack.c.h.b16 %v124
    %v877 = vunpack.c.l.b16 %v125
    %v878 = vunpack.c.h.b16 %v125
    %v879 = vunpack.c.l.b16 %v126
    %v880 = vunpack.c.h.b16 %v126
    %v881 = vunpack.c.l.b16 %v127
    %v882 = vunpack.c.h.b16 %v127
    %v883 = vunpack.c.l.b16 %v128
    %v884 = vunpack.c.h.b16 %v128
    %v885 = vunpack.c.l.b16 %v129
    %v886 = vunpack.c.h.b16 %v129
    %v887 = vunpack.c.l.b16 %v130
    %v888 = vunpack.c.h.b16 %v130
    %v889 = vunpack.c.l.b16 %v131
    %v890 = vunpack.c.h.b16 %v131
    %v891 = vunpack.c.l.b16 %v132
    %v892 = vunpack.c.h.b16 %v132
    %v893 = vunpack.c.l.b16 %v133
    %v894 = vunpack.c.h.b16 %v133
    %v895 = vunpack.c.l.b16 %v134
    %v896 = vunpack.c.h.b16 %v134
    %v897 = vunpack.c.l.b16 %v135
    %v898 = vunpack.c.h.b16 %v135
    %v899 = vunpack.c.l.b16 %v136
    %v900 = vunpack.c.h.b16 %v136
    %v901 = vunpack.c.l.b16 %v137
    %v902 = vunpack.c.h.b16 %v137
    %v903 = vunpack.c.l.b16 %v138
    %v904 = vunpack.c.h.b16 %v138
    %v905 = vunpack.c.l.b16 %v139
    %v906 = vunpack.c.h.b16 %v139
    %v907 = vunpack.c.l.b16 %v140
    %v908 = vunpack.c.h.b16 %v140
    %v909 = vunpack.c.l.b16 %v141
    %v910 = vunpack.c.h.b16 %v141
    %v911 = vunpack.c.l.b16 %v142
    %v912 = vunpack.c.h.b16 %v142
    %v913 = vunpack.c.l.b16 %v143
    %v914 = vunpack.c.h.b16 %v143
    %v915 = vunpack.c.l.b16 %v144
    %v916 = vunpack.c.h.b16 %v144
    %v917 = vunpack.c.l.b16 %v145
    %v918 = vunpack.c.h.b16 %v145
    %v919 = vunpack.c.l.b16 %v146
    %v920 = vunpack.c.h.b16 %v146
    %v921 = vunpack.c.l.b16 %v147
    %v922 = vunpack.c.h.b16 %v147
    %v923 = vunpack.c.l.b16 %v148
    %v924 = vunpack.c.h.b16 %v148
    %v925 = vunpack.c.l.b16 %v149
    %v926 = vunpack.c.h.b16 %v149
    %v927 = vunpack.c.l.b16 %v150
    %v928 = vunpack.c.h.b16 %v150
    %v929 = vunpack.c.l.b16 %v151
    %v930 = vunpack.c.h.b16 %v151
    %v931 = vunpack.c.l.b16 %v152
    %v932 = vunpack.c.h.b16 %v152
    %v933 = vunpack.c.l.b16 %v153
    %v934 = vunpack.c.h.b16 %v153
    %v935 = vunpack.c.l.b16 %v154
    %v936 = vunpack.c.h.b16 %v154
    %v937 = vunpack.c.l.b16 %v155
    %v938 = vunpack.c.h.b16 %v155
    %v939 = vunpack.c.l.b16 %v156
    %v940 = vunpack.c.h.b16 %v156
    %v941 = vunpack.c.l.b16 %v157
    %v942 = vunpack.c.h.b16 %v157
    %v943 = vunpack.c.l.b16 %v158
    %v944 = vunpack.c.h.b16 %v158
    %v945 = vunpack.c.l.b16 %v159
    %v946 = vunpack.c.h.b16 %v159
    %v947 = vunpack.c.l.b16 %v160
    %v948 = vunpack.c.h.b16 %v160
    %v949 = vunpack.c.l.b16 %v161
    %v950 = vunpack.c.h.b16 %v161
    %v951 = vunpack.c.l.b16 %v162
    %v952 = vunpack.c.h.b16 %v162
    %v953 = vunpack.c.l.b16 %v163
    %v954 = vunpack.c.h.b16 %v163
    %v955 = vunpack.c.l.b16 %v164
    %v956 = vunpack.c.h.b16 %v164
    %v957 = vunpack.c.l.b16 %v165
    %v958 = vunpack.c.h.b16 %v165
    %v959 = vunpack.c.l.b16 %v166
    %v960 = vunpack.c.h.b16 %v166
    %v961 = vunpack.c.l.b16 %v167
    %v962 = vunpack.c.h.b16 %v167
    %v963 = vunpack.c.l.b16 %v168
    %v964 = vunpack.c.h.b16 %v168
    %v965 = vunpack.c.l.b16 %v169
    %v966 = vunpack.c.h.b16 %v169
    %v967 = vunpack.c.l.b16 %v170
    %v968 = vunpack.c.h.b16 %v170
    %v969 = vunpack.c.l.b16 %v171
    %v970 = vunpack.c.h.b16 %v171
    %v971 = vunpack.c.l.b16 %v172
    %v972 = vunpack.c.h.b16 %v172
    %v973 = vunpack.c.l.b16 %v173
    %v974 = vunpack.c.h.b16 %v173
    %v975 = vunpack.c.l.b16 %v174
    %v976 = vunpack.c.h.b16 %v174
    %v977 = vunpack.c.l.b16 %v175
    %v978 = vunpack.c.h.b16 %v175
    %v979 = vunpack.c.l.b16 %v176
    %v980 = vunpack.c.h.b16 %v176
    %v981 = vunpack.c.l.b16 %v177
    %v982 = vunpack.c.h.b16 %v177
    %v983 = vunpack.c.l.b16 %v178
    %v984 = vunpack.c.h.b16 %v178
    %v985 = vunpack.c.l.b16 %v179
    %v986 = vunpack.c.h.b16 %v179
    %v987 = vunpack.c.l.b16 %v180
    %v988 = vunpack.c.h.b16 %v180
    %v989 = vunpack.c.l.b16 %v181
    %v990 = vunpack.c.h.b16 %v181
    %v991 = vunpack.c.l.b16 %v182
    %v992 = vunpack.c.h.b16 %v182
    %v993 = vunpack.c.l.b16 %v183
    %v994 = vunpack.c.h.b16 %v183
    %v995 = vunpack.c.l.b16 %v184
    %v996 = vunpack.c.h.b16 %v184
    %v997 = vunpack.c.l.b16 %v185
    %v998 = vunpack.c.h.b16 %v185
    %v999 = vunpack.c.l.b16 %v186
    %v1000 = vunpack.c.h.b16 %v186
    %v1001 = vunpack.c.l.b16 %v187
    %v1002 = vunpack.c.h.b16 %v187
    %v1003 = vunpack.c.l.b16 %v188
    %v1004 = vunpack.c.h.b16 %v188
    %v1005 = vunpack.c.l.b16 %v189
    %v1006 = vunpack.c.h.b16 %v189
    %v1007 = vunpack.c.l.b16 %v190
    %v1008 = vunpack.c.h.b16 %v190
    %v1009 = vunpack.c.l.b16 %v191
    %v1010 = vunpack.c.h.b16 %v191
    %v1011 = vunpack.c.l.b16 %v192
    %v1012 = vunpack.c.h.b16 %v192
    %v1013 = vunpack.c.l.b16 %v193
    %v1014 = vunpack.c.h.b16 %v193
    %v1015 = vunpack.c.l.b16 %v194
    %v1016 = vunpack.c.h.b16 %v194
    %v1017 = vunpack.c.l.b16 %v195
    %v1018 = vunpack.c.h.b16 %v195
    %v1019 = vunpack.c.l.b16 %v196
    %v1020 = vunpack.c.h.b16 %v196
    %v1021 = vunpack.c.l.b16 %v197
    %v1022 = vunpack.c.h.b16 %v197
    %v1023 = vunpack.c.l.b16 %v198
    %v1024 = vunpack.c.h.b16 %v198
    %v1025 = vunpack.c.l.b16 %v199
    %v1026 = vunpack.c.h.b16 %v199
    %v1027 = vunpack.c.l.b16 %v200
    %v1028 = vunpack.c.h.b16 %v200
    %v1029 = vunpack.c.l.b16 %v201
    %v1030 = vunpack.c.h.b16 %v201
    %v1031 = vunpack.c.l.b16 %v202
    %v1032 = vunpack.c.h.b16 %v202
    %v1033 = vunpack.c.l.b16 %v203
    %v1034 = vunpack.c.h.b16 %v203
    %v1035 = vunpack.c.l.b16 %v204
    %v1036 = vunpack.c.h.b16 %v204
    %v1037 = vunpack.c.l.b16 %v205
    %v1038 = vunpack.c.h.b16 %v205
    %v1039 = vunpack.c.l.b16 %v206
    %v1040 = vunpack.c.h.b16 %v206
    %v1041 = vunpack.c.l.b16 %v207
    %v1042 = vunpack.c.h.b16 %v207
    %v1043 = vunpack.c.l.b16 %v208
    %v1044 = vunpack.c.h.b16 %v208
    %v1045 = vunpack.c.l.b16 %v209
    %v1046 = vunpack.c.h.b16 %v209
    %v1047 = vunpack.c.l.b16 %v210
    %v1048 = vunpack.c.h.b16 %v210
    %v1049 = vunpack.c.l.b16 %v211
    %v1050 = vunpack.c.h.b16 %v211
    %v1051 = vunpack.c.l.b16 %v212
    %v1052 = vunpack.c.h.b16 %v212
    %v1053 = vunpack.c.l.b16 %v213
    %v1054 = vunpack.c.h.b16 %v213
    %v1055 = vunpack.c.l.b16 %v214
    %v1056 = vunpack.c.h.b16 %v214
    %v1057 = vunpack.c.l.b16 %v215
    %v1058 = vunpack.c.h.b16 %v215
    %v1059 = vunpack.c.l.b16 %v216
    %v1060 = vunpack.c.h.b16 %v216
    %v1061 = vunpack.c.l.b16 %v217
    %v1062 = vunpack.c.h.b16 %v217
    %v1063 = vunpack.c.l.b16 %v218
    %v1064 = vunpack.c.h.b16 %v218
    %v1065 = vunpack.c.l.b16 %v219
    %v1066 = vunpack.c.h.b16 %v219
    %v1067 = vunpack.c.l.b16 %v220
    %v1068 = vunpack.c.h.b16 %v220
    %v1069 = vunpack.c.l.b16 %v221
    %v1070 = vunpack.c.h.b16 %v221
    %v1071 = vunpack.c.l.b16 %v222
    %v1072 = vunpack.c.h.b16 %v222
    %v1073 = vunpack.c.l.b16 %v223
    %v1074 = vunpack.c.h.b16 %v223
    %v1075 = vunpack.c.l.b16 %v224
    %v1076 = vunpack.c.h.b16 %v224
    %v1077 = vunpack.c.l.b16 %v225
    %v1078 = vunpack.c.h.b16 %v225
    %v1079 = vunpack.c.l.b16 %v226
    %v1080 = vunpack.c.h.b16 %v226
    %v1081 = vunpack.c.l.b16 %v227
    %v1082 = vunpack.c.h.b16 %v227
    %v1083 = vunpack.c.l.b16 %v228
    %v1084 = vunpack.c.h.b16 %v228
    %v1085 = vunpack.c.l.b16 %v229
    %v1086 = vunpack.c.h.b16 %v229
    %v1087 = vunpack.c.l.b16 %v230
    %v1088 = vunpack.c.h.b16 %v230
    %v1089 = vunpack.c.l.b16 %v231
    %v1090 = vunpack.c.h.b16 %v231
    %v1091 = vunpack.c.l.b16 %v232
    %v1092 = vunpack.c.h.b16 %v232
    %v1093 = vunpack.c.l.b16 %v233
    %v1094 = vunpack.c.h.b16 %v233
    %v1095 = vunpack.c.l.b16 %v234
    %v1096 = vunpack.c.h.b16 %v234
    %v1097 = vunpack.c.l.b16 %v235
    %v1098 = vunpack.c.h.b16 %v235
    %v1099 = vunpack.c.l.b16 %v236
    %v1100 = vunpack.c.h.b16 %v236
    %v1101 = vunpack.c.l.b16 %v237
    %v1102 = vunpack.c.h.b16 %v237
    %v1103 = vunpack.c.l.b16 %v238
    %v1104 = vunpack.c.h.b16 %v238
    %v1105 = vunpack.c.l.b16 %v239
    %v1106 = vunpack.c.h.b16 %v239
    %v1107 = vunpack.c.l.b16 %v240
    %v1108 = vunpack.c.h.b16 %v240
    %v1109 = vunpack.c.l.b16 %v241
    %v1110 = vunpack.c.h.b16 %v241
    %v1111 = vunpack.c.l.b16 %v242
    %v1112 = vunpack.c.h.b16 %v242
    %v1113 = vunpack.c.l.b16 %v243
    %v1114 = vunpack.c.h.b16 %v243
    %v1115 = vunpack.c.l.b16 %v244
    %v1116 = vunpack.c.h.b16 %v244
    %v1117 = vunpack.c.l.b16 %v245
    %v1118 = vunpack.c.h.b16 %v245
    %v1119 = vunpack.c.l.b16 %v246
    %v1120 = vunpack.c.h.b16 %v246
    %v1121 = vunpack.c.l.b16 %v247
    %v1122 = vunpack.c.h.b16 %v247
    %v1123 = vunpack.c.l.b16 %v248
    %v1124 = vunpack.c.h.b16 %v248
    %v1125 = vunpack.c.l.b16 %v249
    %v1126 = vunpack.c.h.b16 %v249
    %v1127 = vunpack.c.l.b16 %v250
    %v1128 = vunpack.c.h.b16 %v250
    %v1129 = vunpack.c.l.b16 %v251
    %v1130 = vunpack.c.h.b16 %v251
    %v1131 = vunpack.c.l.b16 %v252
    %v1132 = vunpack.c.h.b16 %v252
    %v1133 = vunpack.c.l.b16 %v253
    %v1134 = vunpack.c.h.b16 %v253
    %v1135 = vunpack.c.l.b16 %v254
    %v1136 = vunpack.c.h.b16 %v254
    %v1137 = vunpack.c.l.b16 %v255
    %v1138 = vunpack.c.h.b16 %v255
    %v1139 = vunpack.c.l.b16 %v256
    %v1140 = vunpack.c.h.b16 %v256
    %v1141 = vunpack.c.l.b16 %v257
    %v1142 = vunpack.c.h.b16 %v257
    %v1143 = vunpack.c.l.b16 %v258
    %v1144 = vunpack.c.h.b16 %v258
    %v1145 = vunpack.c.l.b16 %v259
    %v1146 = vunpack.c.h.b16 %v259
    %v1147 = vunpack.c.l.b16 %v260
    %v1148 = vunpack.c.h.b16 %v260
    %v1149 = vunpack.c.l.b16 %v261
    %v1150 = vunpack.c.h.b16 %v261
    %v1151 = vunpack.c.l.b16 %v262
    %v1152 = vunpack.c.h.b16 %v262
    %v1153 = vunpack.c.l.b16 %v263
    %v1154 = vunpack.c.h.b16 %v263
    %v1155 = vunpack.c.l.b16 %v264
    %v1156 = vunpack.c.h.b16 %v264
    %v1157 = vunpack.c.l.b16 %v265
    %v1158 = vunpack.c.h.b16 %v265
    %v1159 = vunpack.c.l.b16 %v266
    %v1160 = vunpack.c.h.b16 %v266
    %v1161 = vunpack.c.l.b16 %v267
    %v1162 = vunpack.c.h.b16 %v267
    %v1163 = vunpack.c.l.b16 %v268
    %v1164 = vunpack.c.h.b16 %v268
    %v1165 = vunpack.c.l.b16 %v269
    %v1166 = vunpack.c.h.b16 %v269
    %v1167 = vunpack.c.l.b16 %v270
    %v1168 = vunpack.c.h.b16 %v270
    %v1169 = vunpack.c.l.b16 %v271
    %v1170 = vunpack.c.h.b16 %v271
    %v1171 = vunpack.c.l.b16 %v272
    %v1172 = vunpack.c.h.b16 %v272
    %v1173 = vunpack.c.l.b16 %v273
    %v1174 = vunpack.c.h.b16 %v273
    %v1175 = vunpack.c.l.b16 %v274
    %v1176 = vunpack.c.h.b16 %v274
    %v1177 = vunpack.c.l.b16 %v275
    %v1178 = vunpack.c.h.b16 %v275
    %v1179 = vunpack.c.l.b16 %v276
    %v1180 = vunpack.c.h.b16 %v276
    %v1181 = vunpack.c.l.b16 %v277
    %v1182 = vunpack.c.h.b16 %v277
    %v1183 = vunpack.c.l.b16 %v278
    %v1184 = vunpack.c.h.b16 %v278
    %v1185 = vunpack.c.l.b16 %v279
    %v1186 = vunpack.c.h.b16 %v279
    %v1187 = vunpack.c.l.b16 %v280
    %v1188 = vunpack.c.h.b16 %v280
    %v1189 = vunpack.c.l.b16 %v281
    %v1190 = vunpack.c.h.b16 %v281
    %v1191 = vunpack.c.l.b16 %v282
    %v1192 = vunpack.c.h.b16 %v282
    %v1193 = vunpack.c.l.b16 %v283
    %v1194 = vunpack.c.h.b16 %v283
    %v1195 = vunpack.c.l.b16 %v284
    %v1196 = vunpack.c.h.b16 %v284
    %v1197 = vunpack.c.l.b16 %v285
    %v1198 = vunpack.c.h.b16 %v285
    %v1199 = vunpack.c.l.b16 %v286
    %v1200 = vunpack.c.h.b16 %v286
    %v1201 = vunpack.c.l.b16 %v287
    %v1202 = vunpack.c.h.b16 %v287
    %v1203 = vunpack.c.l.b16 %v288
    %v1204 = vunpack.c.h.b16 %v288
    %v1205 = vunpack.c.l.b16 %v289
    %v1206 = vunpack.c.h.b16 %v289
    %v1207 = vunpack.c.l.b16 %v290
    %v1208 = vunpack.c.h.b16 %v290
    %v1209 = vunpack.c.l.b16 %v291
    %v1210 = vunpack.c.h.b16 %v291
    %v1211 = vunpack.c.l.b16 %v292
    %v1212 = vunpack.c.h.b16 %v292
    %v1213 = vunpack.c.l.b16 %v293
    %v1214 = vunpack.c.h.b16 %v293
    %v1215 = vunpack.c.l.b16 %v294
    %v1216 = vunpack.c.h.b16 %v294
    %v1217 = vunpack.c.l.b16 %v295
    %v1218 = vunpack.c.h.b16 %v295
    %v1219 = vunpack.c.l.b16 %v296
    %v1220 = vunpack.c.h.b16 %v296
    %v1221 = vunpack.c.l.b16 %v297
    %v1222 = vunpack.c.h.b16 %v297
    %v1223 = vunpack.c.l.b16 %v298
    %v1224 = vunpack.c.h.b16 %v298
    %v1225 = vunpack.c.l.b16 %v299
    %v1226 = vunpack.c.h.b16 %v299
    %v1227 = vunpack.c.l.b16 %v300
    %v1228 = vunpack.c.h.b16 %v300
    %v1229 = vunpack.c.l.b16 %v301
    %v1230 = vunpack.c.h.b16 %v301
    %v1231 = vunpack.c.l.b16 %v302
    %v1232 = vunpack.c.h.b16 %v302
    %v1233 = vunpack.c.l.b16 %v303
    %v1234 = vunpack.c.h.b16 %v303
    %v1235 = vunpack.c.l.b16 %v304
    %v1236 = vunpack.c.h.b16 %v304
    %v1237 = vunpack.c.l.b16 %v305
    %v1238 = vunpack.c.h.b16 %v305
    %v1239 = vunpack.c.l.b16 %v306
    %v1240 = vunpack.c.h.b16 %v306
    %v1241 = vunpack.c.l.b16 %v307
    %v1242 = vunpack.c.h.b16 %v307
    %v1243 = vunpack.c.l.b16 %v308
    %v1244 = vunpack.c.h.b16 %v308
    %v1245 = vunpack.c.l.b16 %v309
    %v1246 = vunpack.c.h.b16 %v309
    %v1247 = vunpack.c.l.b16 %v310
    %v1248 = vunpack.c.h.b16 %v310
    %v1249 = vunpack.c.l.b16 %v311
    %v1250 = vunpack.c.h.b16 %v311
    %v1251 = vunpack.c.l.b16 %v312
    %v1252 = vunpack.c.h.b16 %v312
    %v1253 = vunpack.c.l.b16 %v313
    %v1254 = vunpack.c.h.b16 %v313
    %v1255 = vunpack.c.l.b16 %v314
    %v1256 = vunpack.c.h.b16 %v314
    %v1257 = vunpack.c.l.b16 %v315
    %v1258 = vunpack.c.h.b16 %v315
    %v1259 = vunpack.c.l.b16 %v316
    %v1260 = vunpack.c.h.b16 %v316
    %v1261 = vunpack.c.l.b16 %v317
    %v1262 = vunpack.c.h.b16 %v317
    %v1263 = vunpack.c.l.b16 %v318
    %v1264 = vunpack.c.h.b16 %v318
    %v1265 = vunpack.c.l.b16 %v319
    %v1266 = vunpack.c.h.b16 %v319
    %v1267 = vunpack.c.l.b16 %v320
    %v1268 = vunpack.c.h.b16 %v320
    %v1269 = vunpack.c.l.b16 %v321
    %v1270 = vunpack.c.h.b16 %v321
    %v1271 = vpack.c.b16 %v763, %v759
    %v1272 = vpack.c.b16 %v764, %v760
    %v1273 = vpack.c.b16 %v765, %v761
    %v1274 = vpack.c.b16 %v766, %v762
    %v1275 = vpack.c.b16 %v771, %v767
    %v1276 = vpack.c.b16 %v772, %v768
    %v1277 = vpack.c.b16 %v773, %v769
    %v1278 = vpack.c.b16 %v774, %v770
    %v1279 = vpack.c.b16 %v779, %v775
    %v1280 = vpack.c.b16 %v780, %v776
    %v1281 = vpack.c.b16 %v781, %v777
    %v1282 = vpack.c.b16 %v782, %v778
    %v1283 = vpack.c.b16 %v787, %v783
    %v1284 = vpack.c.b16 %v788, %v784
    %v1285 = vpack.c.b16 %v789, %v785
    %v1286 = vpack.c.b16 %v790, %v786
    %v1287 = vpack.c.b16 %v795, %v791
    %v1288 = vpack.c.b16 %v796, %v792
    %v1289 = vpack.c.b16 %v797, %v793
    %v1290 = vpack.c.b16 %v798, %v794
    %v1291 = vpack.c.b16 %v803, %v799
    %v1292 = vpack.c.b16 %v804, %v800
    %v1293 = vpack.c.b16 %v805, %v801
    %v1294 = vpack.c.b16 %v806, %v802
    %v1295 = vpack.c.b16 %v811, %v807
    %v1296 = vpack.c.b16 %v812, %v808
    %v1297 = vpack.c.b16 %v813, %v809
    %v1298 = vpack.c.b16 %v814, %v810
    %v1299 = vpack.c.b16 %v819, %v815
    %v1300 = vpack.c.b16 %v820, %v816
    %v1301 = vpack.c.b16 %v821, %v817
    %v1302 = vpack.c.b16 %v822, %v818
    %v1303 = vpack.c.b16 %v827, %v823
    %v1304 = vpack.c.b16 %v828, %v824
    %v1305 = vpack.c.b16 %v829, %v825
    %v1306 = vpack.c.b16 %v830, %v826
    %v1307 = vpack.c.b16 %v835, %v831
    %v1308 = vpack.c.b16 %v836, %v832
    %v1309 = vpack.c.b16 %v837, %v833
    %v1310 = vpack.c.b16 %v838, %v834
    %v1311 = vpack.c.b16 %v843, %v839
    %v1312 = vpack.c.b16 %v844, %v840
    %v1313 = vpack.c.b16 %v845, %v841
    %v1314 = vpack.c.b16 %v846, %v842
    %v1315 = vpack.c.b16 %v851, %v847
    %v1316 = vpack.c.b16 %v852, %v848
    %v1317 = vpack.c.b16 %v853, %v849
    %v1318 = vpack.c.b16 %v854, %v850
    %v1319 = vpack.c.b16 %v859, %v855
    %v1320 = vpack.c.b16 %v860, %v856
    %v1321 = vpack.c.b16 %v861, %v857
    %v1322 = vpack.c.b16 %v862, %v858
    %v1323 = vpack.c.b16 %v867, %v863
    %v1324 = vpack.c.b16 %v868, %v864
    %v1325 = vpack.c.b16 %v869, %v865
    %v1326 = vpack.c.b16 %v870, %v866
    %v1327 = vpack.c.b16 %v875, %v871
    %v1328 = vpack.c.b16 %v876, %v872
    %v1329 = vpack.c.b16 %v877, %v873
    %v1330 = vpack.c.b16 %v878, %v874
    %v1331 = vpack.c.b16 %v883, %v879
    %v1332 = vpack.c.b16 %v884, %v880
    %v1333 = vpack.c.b16 %v885, %v881
    %v1334 = vpack.c.b16 %v886, %v882
    %v1335 = vpack.c.b16 %v891, %v887
    %v1336 = vpack.c.b16 %v892, %v888
    %v1337 = vpack.c.b16 %v893, %v889
    %v1338 = vpack.c.b16 %v894, %v890
    %v1339 = vpack.c.b16 %v899, %v895
    %v1340 = vpack.c.b16 %v900, %v896
    %v1341 = vpack.c.b16 %v901, %v897
    %v1342 = vpack.c.b16 %v902, %v898
    %v1343 = vpack.c.b16 %v907, %v903
    %v1344 = vpack.c.b16 %v908, %v904
    %v1345 = vpack.c.b16 %v909, %v905
    %v1346 = vpack.c.b16 %v910, %v906
    %v1347 = vpack.c.b16 %v915, %v911
    %v1348 = vpack.c.b16 %v916, %v912
    %v1349 = vpack.c.b16 %v917, %v913
    %v1350 = vpack.c.b16 %v918, %v914
    %v1351 = vpack.c.b16 %v923, %v919
    %v1352 = vpack.c.b16 %v924, %v920
    %v1353 = vpack.c.b16 %v925, %v921
    %v1354 = vpack.c.b16 %v926, %v922
    %v1355 = vpack.c.b16 %v931, %v927
    %v1356 = vpack.c.b16 %v932, %v928
    %v1357 = vpack.c.b16 %v933, %v929
    %v1358 = vpack.c.b16 %v934, %v930
    %v1359 = vpack.c.b16 %v939, %v935
    %v1360 = vpack.c.b16 %v940, %v936
    %v1361 = vpack.c.b16 %v941, %v937
    %v1362 = vpack.c.b16 %v942, %v938
    %v1363 = vpack.c.b16 %v947, %v943
    %v1364 = vpack.c.b16 %v948, %v944
    %v1365 = vpack.c.b16 %v949, %v945
    %v1366 = vpack.c.b16 %v950, %v946
    %v1367 = vpack.c.b16 %v955, %v951
    %v1368 = vpack.c.b16 %v956, %v952
    %v1369 = vpack.c.b16 %v957, %v953
    %v1370 = vpack.c.b16 %v958, %v954
    %v1371 = vpack.c.b16 %v963, %v959
    %v1372 = vpack.c.b16 %v964, %v960
    %v1373 = vpack.c.b16 %v965, %v961
    %v1374 = vpack.c.b16 %v966, %v962
    %v1375 = vpack.c.b16 %v971, %v967
    %v1376 = vpack.c.b16 %v972, %v968
    %v1377 = vpack.c.b16 %v973, %v969
    %v1378 = vpack.c.b16 %v974, %v970
    %v1379 = vpack.c.b16 %v979, %v975
    %v1380 = vpack.c.b16 %v980, %v976
    %v1381 = vpack.c.b16 %v981, %v977
    %v1382 = vpack.c.b16 %v982, %v978
    %v1383 = vpack.c.b16 %v987, %v983
    %v1384 = vpack.c.b16 %v988, %v984
    %v1385 = vpack.c.b16 %v989, %v985
    %v1386 = vpack.c.b16 %v990, %v986
    %v1387 = vpack.c.b16 %v995, %v991
    %v1388 = vpack.c.b16 %v996, %v992
    %v1389 = vpack.c.b16 %v997, %v993
    %v1390 = vpack.c.b16 %v998, %v994
    %v1391 = vpack.c.b16 %v1003, %v999
    %v1392 = vpack.c.b16 %v1004, %v1000
    %v1393 = vpack.c.b16 %v1005, %v1001
    %v1394 = vpack.c.b16 %v1006, %v1002
    %v1395 = vpack.c.b16 %v1011, %v1007
    %v1396 = vpack.c.b16 %v1012, %v1008
    %v1397 = vpack.c.b16 %v1013, %v1009
    %v1398 = vpack.c.b16 %v1014, %v1010
    %v1399 = vpack.c.b16 %v1019, %v1015
    %v1400 = vpack.c.b16 %v1020, %v1016
    %v1401 = vpack.c.b16 %v1021, %v1017
    %v1402 = vpack.c.b16 %v1022, %v1018
    %v1403 = vpack.c.b16 %v1027, %v1023
    %v1404 = vpack.c.b16 %v1028, %v1024
    %v1405 = vpack.c.b16 %v1029, %v1025
    %v1406 = vpack.c.b16 %v1030, %v1026
    %v1407 = vpack.c.b16 %v1035, %v1031
    %v1408 = vpack.c.b16 %v1036, %v1032
    %v1409 = vpack.c.b16 %v1037, %v1033
    %v1410 = vpack.c.b16 %v1038, %v1034
    %v1411 = vpack.c.b16 %v1043, %v1039
    %v1412 = vpack.c.b16 %v1044, %v1040
    %v1413 = vpack.c.b16 %v1045, %v1041
    %v1414 = vpack.c.b16 %v1046, %v1042
    %v1415 = vpack.c.b16 %v1051, %v1047
    %v1416 = vpack.c.b16 %v1052, %v1048
    %v1417 = vpack.c.b16 %v1053, %v1049
    %v1418 = vpack.c.b16 %v1054, %v1050
    %v1419 = vpack.c.b16 %v1059, %v1055
    %v1420 = vpack.c.b16 %v1060, %v1056
    %v1421 = vpack.c.b16 %v1061, %v1057
    %v1422 = vpack.c.b16 %v1062, %v1058
    %v1423 = vpack.c.b16 %v1067, %v1063
    %v1424 = vpack.c.b16 %v1068, %v1064
    %v1425 = vpack.c.b16 %v1069, %v1065
    %v1426 = vpack.c.b16 %v1070, %v1066
    %v1427 = vpack.c.b16 %v1075, %v1071
    %v1428 = vpack.c.b16 %v1076, %v1072
    %v1429 = vpack.c.b16 %v1077, %v1073
    %v1430 = vpack.c.b16 %v1078, %v1074
    %v1431 = vpack.c.b16 %v1083, %v1079
    %v1432 = vpack.c.b16 %v1084, %v1080
    %v1433 = vpack.c.b16 %v1085, %v1081
    %v1434 = vpack.c.b16 %v1086, %v1082
    %v1435 = vpack.c.b16 %v1091, %v1087
    %v1436 = vpack.c.b16 %v1092, %v1088
    %v1437 = vpack.c.b16 %v1093, %v1089
    %v1438 = vpack.c.b16 %v1094, %v1090
    %v1439 = vpack.c.b16 %v1099, %v1095
    %v1440 = vpack.c.b16 %v1100, %v1096
    %v1441 = vpack.c.b16 %v1101, %v1097
    %v1442 = vpack.c.b16 %v1102, %v1098
    %v1443 = vpack.c.b16 %v1107, %v1103
    %v1444 = vpack.c.b16 %v1108, %v1104
    %v1445 = vpack.c.b16 %v1109, %v1105
    %v1446 = vpack.c.b16 %v1110, %v1106
    %v1447 = vpack.c.b16 %v1115, %v1111
    %v1448 = vpack.c.b16 %v1116, %v1112
    %v1449 = vpack.c.b16 %v1117, %v1113
    %v1450 = vpack.c.b16 %v1118, %v1114
    %v1451 = vpack.c.b16 %v1123, %v1119
    %v1452 = vpack.c.b16 %v1124, %v1120
    %v1453 = vpack.c.b16 %v1125, %v1121
    %v1454 = vpack.c.b16 %v1126, %v1122
    %v1455 = vpack.c.b16 %v1131, %v1127
    %v1456 = vpack.c.b16 %v1132, %v1128
    %v1457 = vpack.c.b16 %v1133, %v1129
    %v1458 = vpack.c.b16 %v1134, %v1130
    %v1459 = vpack.c.b16 %v1139, %v1135
    %v1460 = vpack.c.b16 %v1140, %v1136
    %v1461 = vpack.c.b16 %v1141, %v1137
    %v1462 = vpack.c.b16 %v1142, %v1138
    %v1463 = vpack.c.b16 %v1147, %v1143
    %v1464 = vpack.c.b16 %v1148, %v1144
    %v1465 = vpack.c.b16 %v1149, %v1145
    %v1466 = vpack.c.b16 %v1150, %v1146
    %v1467 = vpack.c.b16 %v1155, %v1151
    %v1468 = vpack.c.b16 %v1156, %v1152
    %v1469 = vpack.c.b16 %v1157, %v1153
    %v1470 = vpack.c.b16 %v1158, %v1154
    %v1471 = vpack.c.b16 %v1163, %v1159
    %v1472 = vpack.c.b16 %v1164, %v1160
    %v1473 = vpack.c.b16 %v1165, %v1161
    %v1474 = vpack.c.b16 %v1166, %v1162
    %v1475 = vpack.c.b16 %v1171, %v1167
    %v1476 = vpack.c.b16 %v1172, %v1168
    %v1477 = vpack.c.b16 %v1173, %v1169
    %v1478 = vpack.c.b16 %v1174, %v1170
    %v1479 = vpack.c.b16 %v1179, %v1175
    %v1480 = vpack.c.b16 %v1180, %v1176
    %v1481 = vpack.c.b16 %v1181, %v1177
    %v1482 = vpack.c.b16 %v1182, %v1178
    %v1483 = vpack.c.b16 %v1187, %v1183
    %v1484 = vpack.c.b16 %v1188, %v1184
    %v1485 = vpack.c.b16 %v1189, %v1185
    %v1486 = vpack.c.b16 %v1190, %v1186
    %v1487 = vpack.c.b16 %v1195, %v1191
    %v1488 = vpack.c.b16 %v1196, %v1192
    %v1489 = vpack.c.b16 %v1197, %v1193
    %v1490 = vpack.c.b16 %v1198, %v1194
    %v1491 = vpack.c.b16 %v1203, %v1199
    %v1492 = vpack.c.b16 %v1204, %v1200
    %v1493 = vpack.c.b16 %v1205, %v1201
    %v1494 = vpack.c.b16 %v1206, %v1202
    %v1495 = vpack.c.b16 %v1211, %v1207
    %v1496 = vpack.c.b16 %v1212, %v1208
    %v1497 = vpack.c.b16 %v1213, %v1209
    %v1498 = vpack.c.b16 %v1214, %v1210
    %v1499 = vpack.c.b16 %v1219, %v1215
    %v1500 = vpack.c.b16 %v1220, %v1216
    %v1501 = vpack.c.b16 %v1221, %v1217
    %v1502 = vpack.c.b16 %v1222, %v1218
    %v1503 = vpack.c.b16 %v1227, %v1223
    %v1504 = vpack.c.b16 %v1228, %v1224
    %v1505 = vpack.c.b16 %v1229, %v1225
    %v1506 = vpack.c.b16 %v1230, %v1226
    %v1507 = vpack.c.b16 %v1235, %v1231
    %v1508 = vpack.c.b16 %v1236, %v1232
    %v1509 = vpack.c.b16 %v1237, %v1233
    %v1510 = vpack.c.b16 %v1238, %v1234
    %v1511 = vpack.c.b16 %v1243, %v1239
    %v1512 = vpack.c.b16 %v1244, %v1240
    %v1513 = vpack.c.b16 %v1245, %v1241
    %v1514 = vpack.c.b16 %v1246, %v1242
    %v1515 = vpack.c.b16 %v1251, %v1247
    %v1516 = vpack.c.b16 %v1252, %v1248
    %v1517 = vpack.c.b16 %v1253, %v1249
    %v1518 = vpack.c.b16 %v1254, %v1250
    %v1519 = vpack.c.b16 %v1259, %v1255
    %v1520 = vpack.c.b16 %v1260, %v1256
    %v1521 = vpack.c.b16 %v1261, %v1257
    %v1522 = vpack.c.b16 %v1262, %v1258
    %v1523 = vpack.c.b16 %v1267, %v1263
    %v1524 = vpack.c.b16 %v1268, %v1264
    %v1525 = vpack.c.b16 %v1269, %v1265
    %v1526 = vpack.c.b16 %v1270, %v1266
    %1783 = vmatprep.subr.bf16.mxu0 %v1300
    %1784 = vmatpush1.bf16.msra.mxu0 %v1299
    %1785 = vmatprep.subr.bf16.mxu0 %v1296
    %1786 = vmatpush1.bf16.msra.mxu0 %v1295
    %1787 = vmatprep.subr.bf16.mxu0 %v1292
    %1788 = vmatpush1.bf16.msra.mxu0 %v1291
    %1789 = vmatprep.subr.bf16.mxu0 %v1288
    %1790 = vmatpush1.bf16.msra.mxu0 %v1287
    %1791 = vmatprep.subr.bf16.mxu0 %v1284
    %1792 = vmatpush1.bf16.msra.mxu0 %v1283
    %1793 = vmatprep.subr.bf16.mxu0 %v1280
    %1794 = vmatpush1.bf16.msra.mxu0 %v1279
    %1795 = vmatprep.subr.bf16.mxu0 %v1276
    %1796 = vmatpush1.bf16.msra.mxu0 %v1275
    %1797 = vmatprep.subr.bf16.mxu0 %v1272
    %1798 = vmatpush1.bf16.msra.mxu0 %v1271
    %1799 = vmatprep.subr.bf16.mxu0 %v1332
    %1800 = vmatpush2.bf16.msra.mxu0 %v1331
    %1801 = vmatprep.subr.bf16.mxu0 %v1328
    %1802 = vmatpush2.bf16.msra.mxu0 %v1327
    %1803 = vmatprep.subr.bf16.mxu0 %v1324
    %1804 = vmatpush2.bf16.msra.mxu0 %v1323
    %1805 = vmatprep.subr.bf16.mxu0 %v1320
    %1806 = vmatpush2.bf16.msra.mxu0 %v1319
    %1807 = vmatprep.subr.bf16.mxu0 %v1316
    %1808 = vmatpush2.bf16.msra.mxu0 %v1315
    %1809 = vmatprep.subr.bf16.mxu0 %v1312
    %1810 = vmatpush2.bf16.msra.mxu0 %v1311
    %1811 = vmatprep.subr.bf16.mxu0 %v1308
    %1812 = vmatpush2.bf16.msra.mxu0 %v1307
    %1813 = vmatprep.subr.bf16.mxu0 %v1304
    %1814 = vmatpush2.bf16.msra.mxu0 %v1303
    %1815 = vmatprep.mubr.bf16.mxu0 %v483
    %1816 = vmatmul.mubr.bf16.gmra.mxu0 %v469
    %v1817 = vpop.f32.mrf.mxu0
    %v1818 = vadd.f32 %v428, %v1817
    %v1819 = vpop.f32.mrf.mxu0
    %v1820 = vadd.f32 %v432, %v1819
    %v1821 = vpop.f32.mrf.mxu0
    %v1822 = vpop.f32.mrf.mxu0
    %1823 = vdwg.mxu0
    %1824 = vmatprep.subr.bf16.mxu0 %v1364
    %1825 = vmatpush1.bf16.msra.mxu0 %v1363
    %1826 = vmatprep.subr.bf16.mxu0 %v1360
    %1827 = vmatpush1.bf16.msra.mxu0 %v1359
    %1828 = vmatprep.subr.bf16.mxu0 %v1356
    %1829 = vmatpush1.bf16.msra.mxu0 %v1355
    %1830 = vmatprep.subr.bf16.mxu0 %v1352
    %1831 = vmatpush1.bf16.msra.mxu0 %v1351
    %1832 = vmatprep.subr.bf16.mxu0 %v1348
    %1833 = vmatpush1.bf16.msra.mxu0 %v1347
    %1834 = vmatprep.subr.bf16.mxu0 %v1344
    %1835 = vmatpush1.bf16.msra.mxu0 %v1343
    %1836 = vmatprep.subr.bf16.mxu0 %v1340
    %1837 = vmatpush1.bf16.msra.mxu0 %v1339
    %1838 = vmatprep.subr.bf16.mxu0 %v1336
    %1839 = vmatpush1.bf16.msra.mxu0 %v1335
    %1840 = vmatprep.subr.bf16.mxu0 %v1396
    %1841 = vmatpush2.bf16.msra.mxu0 %v1395
    %1842 = vmatprep.subr.bf16.mxu0 %v1392
    %1843 = vmatpush2.bf16.msra.mxu0 %v1391
    %1844 = vmatprep.subr.bf16.mxu0 %v1388
    %1845 = vmatpush2.bf16.msra.mxu0 %v1387
    %1846 = vmatprep.subr.bf16.mxu0 %v1384
    %1847 = vmatpush2.bf16.msra.mxu0 %v1383
    %1848 = vmatprep.subr.bf16.mxu0 %v1380
    %1849 = vmatpush2.bf16.msra.mxu0 %v1379
    %1850 = vmatprep.subr.bf16.mxu0 %v1376
    %1851 = vmatpush2.bf16.msra.mxu0 %v1375
    %1852 = vmatprep.subr.bf16.mxu0 %v1372
    %1853 = vmatpush2.bf16.msra.mxu0 %v1371
    %1854 = vmatprep.subr.bf16.mxu0 %v1368
    %1855 = vmatpush2.bf16.msra.mxu0 %v1367
    %1856 = vmatprep.mubr.bf16.mxu0 %v493
    %1857 = vmatmul.mubr.bf16.gmra.mxu0 %v491
    %v1858 = vpop.f32.mrf.mxu0
    %v1859 = vadd.f32 %v1818, %v1858
    %v1860 = vpop.f32.mrf.mxu0
    %v1861 = vadd.f32 %v1820, %v1860
    %v1862 = vpop.f32.mrf.mxu0
    %v1863 = vpop.f32.mrf.mxu0
    %1864 = vdwg.mxu0
    %1865 = vmatprep.subr.bf16.mxu0 %v1428
    %1866 = vmatpush1.bf16.msra.mxu0 %v1427
    %1867 = vmatprep.subr.bf16.mxu0 %v1424
    %1868 = vmatpush1.bf16.msra.mxu0 %v1423
    %1869 = vmatprep.subr.bf16.mxu0 %v1420
    %1870 = vmatpush1.bf16.msra.mxu0 %v1419
    %1871 = vmatprep.subr.bf16.mxu0 %v1416
    %1872 = vmatpush1.bf16.msra.mxu0 %v1415
    %1873 = vmatprep.subr.bf16.mxu0 %v1412
    %1874 = vmatpush1.bf16.msra.mxu0 %v1411
    %1875 = vmatprep.subr.bf16.mxu0 %v1408
    %1876 = vmatpush1.bf16.msra.mxu0 %v1407
    %1877 = vmatprep.subr.bf16.mxu0 %v1404
    %1878 = vmatpush1.bf16.msra.mxu0 %v1403
    %1879 = vmatprep.subr.bf16.mxu0 %v1400
    %1880 = vmatpush1.bf16.msra.mxu0 %v1399
    %1881 = vmatprep.subr.bf16.mxu0 %v1460
    %1882 = vmatpush2.bf16.msra.mxu0 %v1459
    %1883 = vmatprep.subr.bf16.mxu0 %v1456
    %1884 = vmatpush2.bf16.msra.mxu0 %v1455
    %1885 = vmatprep.subr.bf16.mxu0 %v1452
    %1886 = vmatpush2.bf16.msra.mxu0 %v1451
    %1887 = vmatprep.subr.bf16.mxu0 %v1448
    %1888 = vmatpush2.bf16.msra.mxu0 %v1447
    %1889 = vmatprep.subr.bf16.mxu0 %v1444
    %1890 = vmatpush2.bf16.msra.mxu0 %v1443
    %1891 = vmatprep.subr.bf16.mxu0 %v1440
    %1892 = vmatpush2.bf16.msra.mxu0 %v1439
    %1893 = vmatprep.subr.bf16.mxu0 %v1436
    %1894 = vmatpush2.bf16.msra.mxu0 %v1435
    %1895 = vmatprep.subr.bf16.mxu0 %v1432
    %1896 = vmatpush2.bf16.msra.mxu0 %v1431
    %1897 = vmatprep.mubr.bf16.mxu0 %v490
    %1898 = vmatmul.mubr.bf16.gmra.mxu0 %v476
    %v1899 = vpop.f32.mrf.mxu0
    %v1900 = vadd.f32 %v1859, %v1899
    %v1901 = vpop.f32.mrf.mxu0
    %v1902 = vadd.f32 %v1861, %v1901
    %v1903 = vpop.f32.mrf.mxu0
    %v1904 = vpop.f32.mrf.mxu0
    %1905 = vdwg.mxu0
    %1906 = vmatprep.subr.bf16.mxu0 %v1492
    %1907 = vmatpush1.bf16.msra.mxu0 %v1491
    %1908 = vmatprep.subr.bf16.mxu0 %v1488
    %1909 = vmatpush1.bf16.msra.mxu0 %v1487
    %1910 = vmatprep.subr.bf16.mxu0 %v1484
    %1911 = vmatpush1.bf16.msra.mxu0 %v1483
    %1912 = vmatprep.subr.bf16.mxu0 %v1480
    %1913 = vmatpush1.bf16.msra.mxu0 %v1479
    %1914 = vmatprep.subr.bf16.mxu0 %v1476
    %1915 = vmatpush1.bf16.msra.mxu0 %v1475
    %1916 = vmatprep.subr.bf16.mxu0 %v1472
    %1917 = vmatpush1.bf16.msra.mxu0 %v1471
    %1918 = vmatprep.subr.bf16.mxu0 %v1468
    %1919 = vmatpush1.bf16.msra.mxu0 %v1467
    %1920 = vmatprep.subr.bf16.mxu0 %v1464
    %1921 = vmatpush1.bf16.msra.mxu0 %v1463
    %1922 = vmatprep.subr.bf16.mxu0 %v1524
    %1923 = vmatpush2.bf16.msra.mxu0 %v1523
    %1924 = vmatprep.subr.bf16.mxu0 %v1520
    %1925 = vmatpush2.bf16.msra.mxu0 %v1519
    %1926 = vmatprep.subr.bf16.mxu0 %v1516
    %1927 = vmatpush2.bf16.msra.mxu0 %v1515
    %1928 = vmatprep.subr.bf16.mxu0 %v1512
    %1929 = vmatpush2.bf16.msra.mxu0 %v1511
    %1930 = vmatprep.subr.bf16.mxu0 %v1508
    %1931 = vmatpush2.bf16.msra.mxu0 %v1507
    %1932 = vmatprep.subr.bf16.mxu0 %v1504
    %1933 = vmatpush2.bf16.msra.mxu0 %v1503
    %1934 = vmatprep.subr.bf16.mxu0 %v1500
    %1935 = vmatpush2.bf16.msra.mxu0 %v1499
    %1936 = vmatprep.subr.bf16.mxu0 %v1496
    %1937 = vmatpush2.bf16.msra.mxu0 %v1495
    %1938 = vmatprep.mubr.bf16.mxu0 %v494
    %1939 = vmatmul.mubr.bf16.gmra.mxu0 %v492
    %v1940 = vpop.f32.mrf.mxu0
    %v1941 = vadd.f32 %v1900, %v1940
    %v1942 = vpop.f32.mrf.mxu0
    %v1943 = vadd.f32 %v1902, %v1942
    %v1944 = vpop.f32.mrf.mxu0
    %v1945 = vpop.f32.mrf.mxu0
    %1946 = vdwg.mxu0
    %1947 = vmatprep.subr.bf16.mxu0 %v1302
    %1948 = vmatpush1.bf16.msra.mxu0 %v1301
    %1949 = vmatprep.subr.bf16.mxu0 %v1298
    %1950 = vmatpush1.bf16.msra.mxu0 %v1297
    %1951 = vmatprep.subr.bf16.mxu0 %v1294
    %1952 = vmatpush1.bf16.msra.mxu0 %v1293
    %1953 = vmatprep.subr.bf16.mxu0 %v1290
    %1954 = vmatpush1.bf16.msra.mxu0 %v1289
    %1955 = vmatprep.subr.bf16.mxu0 %v1286
    %1956 = vmatpush1.bf16.msra.mxu0 %v1285
    %1957 = vmatprep.subr.bf16.mxu0 %v1282
    %1958 = vmatpush1.bf16.msra.mxu0 %v1281
    %1959 = vmatprep.subr.bf16.mxu0 %v1278
    %1960 = vmatpush1.bf16.msra.mxu0 %v1277
    %1961 = vmatprep.subr.bf16.mxu0 %v1274
    %1962 = vmatpush1.bf16.msra.mxu0 %v1273
    %1963 = vmatprep.subr.bf16.mxu0 %v1334
    %1964 = vmatpush2.bf16.msra.mxu0 %v1333
    %1965 = vmatprep.subr.bf16.mxu0 %v1330
    %1966 = vmatpush2.bf16.msra.mxu0 %v1329
    %1967 = vmatprep.subr.bf16.mxu0 %v1326
    %1968 = vmatpush2.bf16.msra.mxu0 %v1325
    %1969 = vmatprep.subr.bf16.mxu0 %v1322
    %1970 = vmatpush2.bf16.msra.mxu0 %v1321
    %1971 = vmatprep.subr.bf16.mxu0 %v1318
    %1972 = vmatpush2.bf16.msra.mxu0 %v1317
    %1973 = vmatprep.subr.bf16.mxu0 %v1314
    %1974 = vmatpush2.bf16.msra.mxu0 %v1313
    %1975 = vmatprep.subr.bf16.mxu0 %v1310
    %1976 = vmatpush2.bf16.msra.mxu0 %v1309
    %1977 = vmatprep.subr.bf16.mxu0 %v1306
    %1978 = vmatpush2.bf16.msra.mxu0 %v1305
    %1979 = vmatprep.mubr.bf16.mxu0 %v483
    %1980 = vmatmul.mubr.bf16.gmra.mxu0 %v469
    %v1981 = vpop.f32.mrf.mxu0
    %v1982 = vadd.f32 %v436, %v1981
    %v1983 = vpop.f32.mrf.mxu0
    %v1984 = vadd.f32 %v440, %v1983
    %v1985 = vpop.f32.mrf.mxu0
    %v1986 = vpop.f32.mrf.mxu0
    %1987 = vdwg.mxu0
    %1988 = vmatprep.subr.bf16.mxu0 %v1366
    %1989 = vmatpush1.bf16.msra.mxu0 %v1365
    %1990 = vmatprep.subr.bf16.mxu0 %v1362
    %1991 = vmatpush1.bf16.msra.mxu0 %v1361
    %1992 = vmatprep.subr.bf16.mxu0 %v1358
    %1993 = vmatpush1.bf16.msra.mxu0 %v1357
    %1994 = vmatprep.subr.bf16.mxu0 %v1354
    %1995 = vmatpush1.bf16.msra.mxu0 %v1353
    %1996 = vmatprep.subr.bf16.mxu0 %v1350
    %1997 = vmatpush1.bf16.msra.mxu0 %v1349
    %1998 = vmatprep.subr.bf16.mxu0 %v1346
    %1999 = vmatpush1.bf16.msra.mxu0 %v1345
    %2000 = vmatprep.subr.bf16.mxu0 %v1342
    %2001 = vmatpush1.bf16.msra.mxu0 %v1341
    %2002 = vmatprep.subr.bf16.mxu0 %v1338
    %2003 = vmatpush1.bf16.msra.mxu0 %v1337
    %2004 = vmatprep.subr.bf16.mxu0 %v1398
    %2005 = vmatpush2.bf16.msra.mxu0 %v1397
    %2006 = vmatprep.subr.bf16.mxu0 %v1394
    %2007 = vmatpush2.bf16.msra.mxu0 %v1393
    %2008 = vmatprep.subr.bf16.mxu0 %v1390
    %2009 = vmatpush2.bf16.msra.mxu0 %v1389
    %2010 = vmatprep.subr.bf16.mxu0 %v1386
    %2011 = vmatpush2.bf16.msra.mxu0 %v1385
    %2012 = vmatprep.subr.bf16.mxu0 %v1382
    %2013 = vmatpush2.bf16.msra.mxu0 %v1381
    %2014 = vmatprep.subr.bf16.mxu0 %v1378
    %2015 = vmatpush2.bf16.msra.mxu0 %v1377
    %2016 = vmatprep.subr.bf16.mxu0 %v1374
    %2017 = vmatpush2.bf16.msra.mxu0 %v1373
    %2018 = vmatprep.subr.bf16.mxu0 %v1370
    %2019 = vmatpush2.bf16.msra.mxu0 %v1369
    %2020 = vmatprep.mubr.bf16.mxu0 %v493
    %2021 = vmatmul.mubr.bf16.gmra.mxu0 %v491
    %v2022 = vpop.f32.mrf.mxu0
    %v2023 = vadd.f32 %v1982, %v2022
    %v2024 = vpop.f32.mrf.mxu0
    %v2025 = vadd.f32 %v1984, %v2024
    %v2026 = vpop.f32.mrf.mxu0
    %v2027 = vpop.f32.mrf.mxu0
    %2028 = vdwg.mxu0
    %2029 = vmatprep.subr.bf16.mxu0 %v1430
    %2030 = vmatpush1.bf16.msra.mxu0 %v1429
    %2031 = vmatprep.subr.bf16.mxu0 %v1426
    %2032 = vmatpush1.bf16.msra.mxu0 %v1425
    %2033 = vmatprep.subr.bf16.mxu0 %v1422
    %2034 = vmatpush1.bf16.msra.mxu0 %v1421
    %2035 = vmatprep.subr.bf16.mxu0 %v1418
    %2036 = vmatpush1.bf16.msra.mxu0 %v1417
    %2037 = vmatprep.subr.bf16.mxu0 %v1414
    %2038 = vmatpush1.bf16.msra.mxu0 %v1413
    %2039 = vmatprep.subr.bf16.mxu0 %v1410
    %2040 = vmatpush1.bf16.msra.mxu0 %v1409
    %2041 = vmatprep.subr.bf16.mxu0 %v1406
    %2042 = vmatpush1.bf16.msra.mxu0 %v1405
    %2043 = vmatprep.subr.bf16.mxu0 %v1402
    %2044 = vmatpush1.bf16.msra.mxu0 %v1401
    %2045 = vmatprep.subr.bf16.mxu0 %v1462
    %2046 = vmatpush2.bf16.msra.mxu0 %v1461
    %2047 = vmatprep.subr.bf16.mxu0 %v1458
    %2048 = vmatpush2.bf16.msra.mxu0 %v1457
    %2049 = vmatprep.subr.bf16.mxu0 %v1454
    %2050 = vmatpush2.bf16.msra.mxu0 %v1453
    %2051 = vmatprep.subr.bf16.mxu0 %v1450
    %2052 = vmatpush2.bf16.msra.mxu0 %v1449
    %2053 = vmatprep.subr.bf16.mxu0 %v1446
    %2054 = vmatpush2.bf16.msra.mxu0 %v1445
    %2055 = vmatprep.subr.bf16.mxu0 %v1442
    %2056 = vmatpush2.bf16.msra.mxu0 %v1441
    %2057 = vmatprep.subr.bf16.mxu0 %v1438
    %2058 = vmatpush2.bf16.msra.mxu0 %v1437
    %2059 = vmatprep.subr.bf16.mxu0 %v1434
    %2060 = vmatpush2.bf16.msra.mxu0 %v1433
    %2061 = vmatprep.mubr.bf16.mxu0 %v490
    %2062 = vmatmul.mubr.bf16.gmra.mxu0 %v476
    %v2063 = vpop.f32.mrf.mxu0
    %v2064 = vadd.f32 %v2023, %v2063
    %v2065 = vpop.f32.mrf.mxu0
    %v2066 = vadd.f32 %v2025, %v2065
    %v2067 = vpop.f32.mrf.mxu0
    %v2068 = vpop.f32.mrf.mxu0
    %2069 = vdwg.mxu0
    %2070 = vmatprep.subr.bf16.mxu0 %v1494
    %2071 = vmatpush1.bf16.msra.mxu0 %v1493
    %2072 = vmatprep.subr.bf16.mxu0 %v1490
    %2073 = vmatpush1.bf16.msra.mxu0 %v1489
    %2074 = vmatprep.subr.bf16.mxu0 %v1486
    %2075 = vmatpush1.bf16.msra.mxu0 %v1485
    %2076 = vmatprep.subr.bf16.mxu0 %v1482
    %2077 = vmatpush1.bf16.msra.mxu0 %v1481
    %2078 = vmatprep.subr.bf16.mxu0 %v1478
    %2079 = vmatpush1.bf16.msra.mxu0 %v1477
    %2080 = vmatprep.subr.bf16.mxu0 %v1474
    %2081 = vmatpush1.bf16.msra.mxu0 %v1473
    %2082 = vmatprep.subr.bf16.mxu0 %v1470
    %2083 = vmatpush1.bf16.msra.mxu0 %v1469
    %2084 = vmatprep.subr.bf16.mxu0 %v1466
    %2085 = vmatpush1.bf16.msra.mxu0 %v1465
    %2086 = vmatprep.subr.bf16.mxu0 %v1526
    %2087 = vmatpush2.bf16.msra.mxu0 %v1525
    %2088 = vmatprep.subr.bf16.mxu0 %v1522
    %2089 = vmatpush2.bf16.msra.mxu0 %v1521
    %2090 = vmatprep.subr.bf16.mxu0 %v1518
    %2091 = vmatpush2.bf16.msra.mxu0 %v1517
    %2092 = vmatprep.subr.bf16.mxu0 %v1514
    %2093 = vmatpush2.bf16.msra.mxu0 %v1513
    %2094 = vmatprep.subr.bf16.mxu0 %v1510
    %2095 = vmatpush2.bf16.msra.mxu0 %v1509
    %2096 = vmatprep.subr.bf16.mxu0 %v1506
    %2097 = vmatpush2.bf16.msra.mxu0 %v1505
    %2098 = vmatprep.subr.bf16.mxu0 %v1502
    %2099 = vmatpush2.bf16.msra.mxu0 %v1501
    %2100 = vmatprep.subr.bf16.mxu0 %v1498
    %2101 = vmatpush2.bf16.msra.mxu0 %v1497
    %2102 = vmatprep.mubr.bf16.mxu0 %v494
    %2103 = vmatmul.mubr.bf16.gmra.mxu0 %v492
    %v2104 = vpop.f32.mrf.mxu0
    %v2105 = vadd.f32 %v2064, %v2104
    %v2106 = vpop.f32.mrf.mxu0
    %v2107 = vadd.f32 %v2066, %v2106
    %v2108 = vpop.f32.mrf.mxu0
    %v2109 = vpop.f32.mrf.mxu0
    %2110 = vdwg.mxu0
    %v2111 = vsub.f32 0.0, %v1941
    %v2112 = vsub.f32 0.0, %v1943
    %v2113 = vsub.f32 0.0, %v2105
    %v2114 = vsub.f32 0.0, %v2107
    %v2115 = vmul.f32 %v2111, 1.442695
    %v2116 = vpow.pop %v2115
    %v2117 = vmul.f32 %v2112, 1.442695
    %v2118 = vpow.pop %v2117
    %v2119 = vmul.f32 %v2113, 1.442695
    %v2120 = vpow.pop %v2119
    %v2121 = vmul.f32 %v2114, 1.442695
    %v2122 = vpow.pop %v2121
    %v2123 = vadd.f32 %v2116, 1.0
    %v2124 = vadd.f32 %v2118, 1.0
    %v2125 = vadd.f32 %v2120, 1.0
    %v2126 = vadd.f32 %v2122, 1.0
    %v2127 = vrcp.pop %v2123
    %v2128 = vrcp.pop %v2124
    %v2129 = vrcp.pop %v2125
    %v2130 = vrcp.pop %v2126
    %v2131 = vlaneseq
    %v2132 = vshrl.u32 %v2131, 7
    %v2133 = vsub.s32 0, %v2132
    %v2134 = vrot.slane %v323, %v2133
    %v2135 = vlaneseq
    %v2136 = vshrl.u32 %v2135, 7
    %v2137 = vsub.s32 0, %v2136
    %v2138 = vrot.slane %v324, %v2137
    %v2139 = vlaneseq
    %v2140 = vshrl.u32 %v2139, 7
    %v2141 = vsub.s32 0, %v2140
    %v2142 = vrot.slane %v325, %v2141
    %v2143 = vlaneseq
    %v2144 = vshrl.u32 %v2143, 7
    %v2145 = vsub.s32 0, %v2144
    %v2146 = vrot.slane %v326, %v2145
    %v2147 = vmul.f32 %v2134, %v2127
    %v2148 = vmul.f32 %v2138, %v2128
    %v2149 = vmul.f32 %v2142, %v2129
    %v2150 = vmul.f32 %v2146, %v2130
    %v2151 = vmul.f32 %v2147, %v61
    %v2152 = vmul.f32 %v2148, %v62
    %v2153 = vmul.f32 %v2149, %v63
    %v2154 = vmul.f32 %v2150, %v64
    %v2155 = vlaneseq
    %v2156 = vshrl.u32 %v2155, 7
    %v2157 = vsub.s32 1, %v2156
    %v2158 = vrot.slane %v323, %v2157
    %v2159 = vlaneseq
    %v2160 = vshrl.u32 %v2159, 7
    %v2161 = vsub.s32 1, %v2160
    %v2162 = vrot.slane %v324, %v2161
    %v2163 = vlaneseq
    %v2164 = vshrl.u32 %v2163, 7
    %v2165 = vsub.s32 1, %v2164
    %v2166 = vrot.slane %v325, %v2165
    %v2167 = vlaneseq
    %v2168 = vshrl.u32 %v2167, 7
    %v2169 = vsub.s32 1, %v2168
    %v2170 = vrot.slane %v326, %v2169
    %v2171 = vmul.f32 %v2158, %v61
    %v2172 = vmul.f32 %v2162, %v62
    %v2173 = vmul.f32 %v2166, %v63
    %v2174 = vmul.f32 %v2170, %v64
    %v2175 = vlaneseq
    %v2176 = vshrl.u32 %v2175, 7
    %v2177 = vsub.s32 2, %v2176
    %v2178 = vrot.slane %v323, %v2177
    %v2179 = vlaneseq
    %v2180 = vshrl.u32 %v2179, 7
    %v2181 = vsub.s32 2, %v2180
    %v2182 = vrot.slane %v324, %v2181
    %v2183 = vlaneseq
    %v2184 = vshrl.u32 %v2183, 7
    %v2185 = vsub.s32 2, %v2184
    %v2186 = vrot.slane %v325, %v2185
    %v2187 = vlaneseq
    %v2188 = vshrl.u32 %v2187, 7
    %v2189 = vsub.s32 2, %v2188
    %v2190 = vrot.slane %v326, %v2189
    %v2191 = vmul.f32 %v2178, %v61
    %v2192 = vmul.f32 %v2182, %v62
    %v2193 = vmul.f32 %v2186, %v63
    %v2194 = vmul.f32 %v2190, %v64
    %v2195 = vlaneseq
    %v2196 = vshrl.u32 %v2195, 7
    %v2197 = vsub.s32 3, %v2196
    %v2198 = vrot.slane %v323, %v2197
    %v2199 = vlaneseq
    %v2200 = vshrl.u32 %v2199, 7
    %v2201 = vsub.s32 3, %v2200
    %v2202 = vrot.slane %v324, %v2201
    %v2203 = vlaneseq
    %v2204 = vshrl.u32 %v2203, 7
    %v2205 = vsub.s32 3, %v2204
    %v2206 = vrot.slane %v325, %v2205
    %v2207 = vlaneseq
    %v2208 = vshrl.u32 %v2207, 7
    %v2209 = vsub.s32 3, %v2208
    %v2210 = vrot.slane %v326, %v2209
    %v2211 = vmul.f32 %v2198, %v61
    %v2212 = vmul.f32 %v2202, %v62
    %v2213 = vmul.f32 %v2206, %v63
    %v2214 = vmul.f32 %v2210, %v64
    %v2215 = vlaneseq
    %v2216 = vshrl.u32 %v2215, 7
    %v2217 = vsub.s32 4, %v2216
    %v2218 = vrot.slane %v323, %v2217
    %v2219 = vlaneseq
    %v2220 = vshrl.u32 %v2219, 7
    %v2221 = vsub.s32 4, %v2220
    %v2222 = vrot.slane %v324, %v2221
    %v2223 = vlaneseq
    %v2224 = vshrl.u32 %v2223, 7
    %v2225 = vsub.s32 4, %v2224
    %v2226 = vrot.slane %v325, %v2225
    %v2227 = vlaneseq
    %v2228 = vshrl.u32 %v2227, 7
    %v2229 = vsub.s32 4, %v2228
    %v2230 = vrot.slane %v326, %v2229
    %v2231 = vmul.f32 %v2218, %v61
    %v2232 = vmul.f32 %v2222, %v62
    %v2233 = vmul.f32 %v2226, %v63
    %v2234 = vmul.f32 %v2230, %v64
    %v2239 = vrot.slane %v2171, 2
    %v2240 = vrot.slane %v2172, 2
    %v2241 = vrot.slane %v2173, 2
    %v2242 = vrot.slane %v2174, 2
    %v2247 = vsub.f32 %v2151, %v2239
    %v2248 = vsub.f32 %v2152, %v2240
    %v2249 = vsub.f32 %v2153, %v2241
    %v2250 = vsub.f32 %v2154, %v2242
    %v2251 = vsub.f32 %v61, %v2151
    %v2252 = vsub.f32 %v62, %v2152
    %v2253 = vsub.f32 %v63, %v2153
    %v2254 = vsub.f32 %v64, %v2154
    %v2259 = vrot.slane %v2191, 4
    %v2260 = vrot.slane %v2192, 4
    %v2261 = vrot.slane %v2193, 4
    %v2262 = vrot.slane %v2194, 4
    %v2267 = vadd.f32 %v2251, %v2259
    %v2268 = vadd.f32 %v2252, %v2260
    %v2269 = vadd.f32 %v2253, %v2261
    %v2270 = vadd.f32 %v2254, %v2262
    %v2275 = vrot.slane %v2247, 6
    %v2276 = vrot.slane %v2248, 6
    %v2277 = vrot.slane %v2249, 6
    %v2278 = vrot.slane %v2250, 6
    %v2283 = vadd.f32 %v61, %v2275
    %v2284 = vadd.f32 %v62, %v2276
    %v2285 = vadd.f32 %v63, %v2277
    %v2286 = vadd.f32 %v64, %v2278
    %v2287 = vrot.slane %v2171, 6
    %v2288 = vrot.slane %v2172, 6
    %v2289 = vrot.slane %v2173, 6
    %v2290 = vrot.slane %v2174, 6
    %v2295 = vadd.f32 %v61, %v2287
    %v2296 = vadd.f32 %v62, %v2288
    %v2297 = vadd.f32 %v63, %v2289
    %v2298 = vadd.f32 %v64, %v2290
    %v2303 = vrot.slane %v2231, 2
    %v2304 = vrot.slane %v2232, 2
    %v2305 = vrot.slane %v2233, 2
    %v2306 = vrot.slane %v2234, 2
    %v2311 = vadd.f32 %v2295, %v2303
    %v2312 = vadd.f32 %v2296, %v2304
    %v2313 = vadd.f32 %v2297, %v2305
    %v2314 = vadd.f32 %v2298, %v2306
    %v2315 = vsub.f32 %v2311, %v2191
    %v2316 = vsub.f32 %v2312, %v2192
    %v2317 = vsub.f32 %v2313, %v2193
    %v2318 = vsub.f32 %v2314, %v2194
    %v2319 = vsub.f32 %v2315, %v2211
    %v2320 = vsub.f32 %v2316, %v2212
    %v2321 = vsub.f32 %v2317, %v2213
    %v2322 = vsub.f32 %v2318, %v2214
    %v2327 = vrot.slane %v2211, 6
    %v2328 = vrot.slane %v2212, 6
    %v2329 = vrot.slane %v2213, 6
    %v2330 = vrot.slane %v2214, 6
    %v2335 = vadd.f32 %v61, %v2327
    %v2336 = vadd.f32 %v62, %v2328
    %v2337 = vadd.f32 %v63, %v2329
    %v2338 = vadd.f32 %v64, %v2330
    %v2339 = vsub.f32 %v2335, %v2231
    %v2340 = vsub.f32 %v2336, %v2232
    %v2341 = vsub.f32 %v2337, %v2233
    %v2342 = vsub.f32 %v2338, %v2234
    %v2343 = vlaneseq
    %v2344 = vshrl.u32 %v2343, 7
    %v2345 = vsub.s32 5, %v2344
    %v2346 = vrot.slane %v323, %v2345
    %v2347 = vlaneseq
    %v2348 = vshrl.u32 %v2347, 7
    %v2349 = vsub.s32 5, %v2348
    %v2350 = vrot.slane %v324, %v2349
    %v2351 = vlaneseq
    %v2352 = vshrl.u32 %v2351, 7
    %v2353 = vsub.s32 5, %v2352
    %v2354 = vrot.slane %v325, %v2353
    %v2355 = vlaneseq
    %v2356 = vshrl.u32 %v2355, 7
    %v2357 = vsub.s32 5, %v2356
    %v2358 = vrot.slane %v326, %v2357
    %v2359 = vmul.f32 %v2346, %v2283
    %v2360 = vmul.f32 %v2350, %v2284
    %v2361 = vmul.f32 %v2354, %v2285
    %v2362 = vmul.f32 %v2358, %v2286
    %v2363 = vlaneseq
    %v2364 = vshrl.u32 %v2363, 7
    %v2365 = vsub.s32 6, %v2364
    %v2366 = vrot.slane %v323, %v2365
    %v2367 = vlaneseq
    %v2368 = vshrl.u32 %v2367, 7
    %v2369 = vsub.s32 6, %v2368
    %v2370 = vrot.slane %v324, %v2369
    %v2371 = vlaneseq
    %v2372 = vshrl.u32 %v2371, 7
    %v2373 = vsub.s32 6, %v2372
    %v2374 = vrot.slane %v325, %v2373
    %v2375 = vlaneseq
    %v2376 = vshrl.u32 %v2375, 7
    %v2377 = vsub.s32 6, %v2376
    %v2378 = vrot.slane %v326, %v2377
    %v2379 = vmul.f32 %v2366, %v2247
    %v2380 = vmul.f32 %v2370, %v2248
    %v2381 = vmul.f32 %v2374, %v2249
    %v2382 = vmul.f32 %v2378, %v2250
    %v2387 = vrot.slane %v2379, 6
    %v2388 = vrot.slane %v2380, 6
    %v2389 = vrot.slane %v2381, 6
    %v2390 = vrot.slane %v2382, 6
    %v2395 = vadd.f32 %v2359, %v2387
    %v2396 = vadd.f32 %v2360, %v2388
    %v2397 = vadd.f32 %v2361, %v2389
    %v2398 = vadd.f32 %v2362, %v2390
    %v2399 = vlaneseq
    %v2400 = vshrl.u32 %v2399, 7
    %v2401 = vsub.s32 7, %v2400
    %v2402 = vrot.slane %v323, %v2401
    %v2403 = vlaneseq
    %v2404 = vshrl.u32 %v2403, 7
    %v2405 = vsub.s32 7, %v2404
    %v2406 = vrot.slane %v324, %v2405
    %v2407 = vlaneseq
    %v2408 = vshrl.u32 %v2407, 7
    %v2409 = vsub.s32 7, %v2408
    %v2410 = vrot.slane %v325, %v2409
    %v2411 = vlaneseq
    %v2412 = vshrl.u32 %v2411, 7
    %v2413 = vsub.s32 7, %v2412
    %v2414 = vrot.slane %v326, %v2413
    %v2415 = vadd.f32 %v2395, %v2402
    %v2416 = vadd.f32 %v2396, %v2406
    %v2417 = vadd.f32 %v2397, %v2410
    %v2418 = vadd.f32 %v2398, %v2414
    %v2419 = vmax.f32 %v2415, 0.0
    %v2420 = vmax.f32 %v2416, 0.0
    %v2421 = vmax.f32 %v2417, 0.0
    %v2422 = vmax.f32 %v2418, 0.0
    %v2423 = vpack.c.bf16 %v2419, %v2419
    %v2424 = vpack.c.bf16 %v2420, %v2420
    %v2425 = vpack.c.bf16 %v2421, %v2421
    %v2426 = vpack.c.bf16 %v2422, %v2422
    %v2428 = vlaneseq
    %v2429 = vshrl.u32 %v2428, 7
    %v2430 = vsub.s32 0, %v2429
    %v2431 = vrot.slane %v391, %v2430
    %v2432 = vlaneseq
    %v2433 = vshrl.u32 %v2432, 7
    %v2434 = vsub.s32 1, %v2433
    %v2435 = vrot.slane %v391, %v2434
    %v2442 = vrot.slane %v2423, 1
    %v2443 = vrot.slane %v2424, 1
    %v2444 = vrot.slane %v2425, 1
    %v2445 = vrot.slane %v2426, 1
    %v2514 = vunpack.c.l.b16 %v327
    %v2515 = vunpack.c.h.b16 %v327
    %v2516 = vunpack.c.l.b16 %v328
    %v2517 = vunpack.c.h.b16 %v328
    %v2518 = vunpack.c.l.b16 %v329
    %v2519 = vunpack.c.h.b16 %v329
    %v2520 = vunpack.c.l.b16 %v330
    %v2521 = vunpack.c.h.b16 %v330
    %v2522 = vunpack.c.l.b16 %v331
    %v2523 = vunpack.c.h.b16 %v331
    %v2524 = vunpack.c.l.b16 %v332
    %v2525 = vunpack.c.h.b16 %v332
    %v2526 = vunpack.c.l.b16 %v333
    %v2527 = vunpack.c.h.b16 %v333
    %v2528 = vunpack.c.l.b16 %v334
    %v2529 = vunpack.c.h.b16 %v334
    %v2530 = vunpack.c.l.b16 %v335
    %v2531 = vunpack.c.h.b16 %v335
    %v2532 = vunpack.c.l.b16 %v336
    %v2533 = vunpack.c.h.b16 %v336
    %v2534 = vunpack.c.l.b16 %v337
    %v2535 = vunpack.c.h.b16 %v337
    %v2536 = vunpack.c.l.b16 %v338
    %v2537 = vunpack.c.h.b16 %v338
    %v2538 = vunpack.c.l.b16 %v339
    %v2539 = vunpack.c.h.b16 %v339
    %v2540 = vunpack.c.l.b16 %v340
    %v2541 = vunpack.c.h.b16 %v340
    %v2542 = vunpack.c.l.b16 %v341
    %v2543 = vunpack.c.h.b16 %v341
    %v2544 = vunpack.c.l.b16 %v342
    %v2545 = vunpack.c.h.b16 %v342
    %v2546 = vunpack.c.l.b16 %v343
    %v2547 = vunpack.c.h.b16 %v343
    %v2548 = vunpack.c.l.b16 %v344
    %v2549 = vunpack.c.h.b16 %v344
    %v2550 = vunpack.c.l.b16 %v345
    %v2551 = vunpack.c.h.b16 %v345
    %v2552 = vunpack.c.l.b16 %v346
    %v2553 = vunpack.c.h.b16 %v346
    %v2554 = vunpack.c.l.b16 %v347
    %v2555 = vunpack.c.h.b16 %v347
    %v2556 = vunpack.c.l.b16 %v348
    %v2557 = vunpack.c.h.b16 %v348
    %v2558 = vunpack.c.l.b16 %v349
    %v2559 = vunpack.c.h.b16 %v349
    %v2560 = vunpack.c.l.b16 %v350
    %v2561 = vunpack.c.h.b16 %v350
    %v2562 = vunpack.c.l.b16 %v351
    %v2563 = vunpack.c.h.b16 %v351
    %v2564 = vunpack.c.l.b16 %v352
    %v2565 = vunpack.c.h.b16 %v352
    %v2566 = vunpack.c.l.b16 %v353
    %v2567 = vunpack.c.h.b16 %v353
    %v2568 = vunpack.c.l.b16 %v354
    %v2569 = vunpack.c.h.b16 %v354
    %v2570 = vunpack.c.l.b16 %v355
    %v2571 = vunpack.c.h.b16 %v355
    %v2572 = vunpack.c.l.b16 %v356
    %v2573 = vunpack.c.h.b16 %v356
    %v2574 = vunpack.c.l.b16 %v357
    %v2575 = vunpack.c.h.b16 %v357
    %v2576 = vunpack.c.l.b16 %v358
    %v2577 = vunpack.c.h.b16 %v358
    %v2578 = vunpack.c.l.b16 %v359
    %v2579 = vunpack.c.h.b16 %v359
    %v2580 = vunpack.c.l.b16 %v360
    %v2581 = vunpack.c.h.b16 %v360
    %v2582 = vunpack.c.l.b16 %v361
    %v2583 = vunpack.c.h.b16 %v361
    %v2584 = vunpack.c.l.b16 %v362
    %v2585 = vunpack.c.h.b16 %v362
    %v2586 = vunpack.c.l.b16 %v363
    %v2587 = vunpack.c.h.b16 %v363
    %v2588 = vunpack.c.l.b16 %v364
    %v2589 = vunpack.c.h.b16 %v364
    %v2590 = vunpack.c.l.b16 %v365
    %v2591 = vunpack.c.h.b16 %v365
    %v2592 = vunpack.c.l.b16 %v366
    %v2593 = vunpack.c.h.b16 %v366
    %v2594 = vunpack.c.l.b16 %v367
    %v2595 = vunpack.c.h.b16 %v367
    %v2596 = vunpack.c.l.b16 %v368
    %v2597 = vunpack.c.h.b16 %v368
    %v2598 = vunpack.c.l.b16 %v369
    %v2599 = vunpack.c.h.b16 %v369
    %v2600 = vunpack.c.l.b16 %v370
    %v2601 = vunpack.c.h.b16 %v370
    %v2602 = vunpack.c.l.b16 %v371
    %v2603 = vunpack.c.h.b16 %v371
    %v2604 = vunpack.c.l.b16 %v372
    %v2605 = vunpack.c.h.b16 %v372
    %v2606 = vunpack.c.l.b16 %v373
    %v2607 = vunpack.c.h.b16 %v373
    %v2608 = vunpack.c.l.b16 %v374
    %v2609 = vunpack.c.h.b16 %v374
    %v2610 = vunpack.c.l.b16 %v375
    %v2611 = vunpack.c.h.b16 %v375
    %v2612 = vunpack.c.l.b16 %v376
    %v2613 = vunpack.c.h.b16 %v376
    %v2614 = vunpack.c.l.b16 %v377
    %v2615 = vunpack.c.h.b16 %v377
    %v2616 = vunpack.c.l.b16 %v378
    %v2617 = vunpack.c.h.b16 %v378
    %v2618 = vunpack.c.l.b16 %v379
    %v2619 = vunpack.c.h.b16 %v379
    %v2620 = vunpack.c.l.b16 %v380
    %v2621 = vunpack.c.h.b16 %v380
    %v2622 = vunpack.c.l.b16 %v381
    %v2623 = vunpack.c.h.b16 %v381
    %v2624 = vunpack.c.l.b16 %v382
    %v2625 = vunpack.c.h.b16 %v382
    %v2626 = vunpack.c.l.b16 %v383
    %v2627 = vunpack.c.h.b16 %v383
    %v2628 = vunpack.c.l.b16 %v384
    %v2629 = vunpack.c.h.b16 %v384
    %v2630 = vunpack.c.l.b16 %v385
    %v2631 = vunpack.c.h.b16 %v385
    %v2632 = vunpack.c.l.b16 %v386
    %v2633 = vunpack.c.h.b16 %v386
    %v2634 = vunpack.c.l.b16 %v387
    %v2635 = vunpack.c.h.b16 %v387
    %v2636 = vunpack.c.l.b16 %v388
    %v2637 = vunpack.c.h.b16 %v388
    %v2638 = vunpack.c.l.b16 %v389
    %v2639 = vunpack.c.h.b16 %v389
    %v2640 = vunpack.c.l.b16 %v390
    %v2641 = vunpack.c.h.b16 %v390
    %v2642 = vpack.c.b16 %v2516, %v2514
    %v2643 = vpack.c.b16 %v2517, %v2515
    %v2644 = vpack.c.b16 %v2520, %v2518
    %v2645 = vpack.c.b16 %v2521, %v2519
    %v2646 = vpack.c.b16 %v2524, %v2522
    %v2647 = vpack.c.b16 %v2525, %v2523
    %v2648 = vpack.c.b16 %v2528, %v2526
    %v2649 = vpack.c.b16 %v2529, %v2527
    %v2650 = vpack.c.b16 %v2532, %v2530
    %v2651 = vpack.c.b16 %v2533, %v2531
    %v2652 = vpack.c.b16 %v2536, %v2534
    %v2653 = vpack.c.b16 %v2537, %v2535
    %v2654 = vpack.c.b16 %v2540, %v2538
    %v2655 = vpack.c.b16 %v2541, %v2539
    %v2656 = vpack.c.b16 %v2544, %v2542
    %v2657 = vpack.c.b16 %v2545, %v2543
    %v2658 = vpack.c.b16 %v2548, %v2546
    %v2659 = vpack.c.b16 %v2549, %v2547
    %v2660 = vpack.c.b16 %v2552, %v2550
    %v2661 = vpack.c.b16 %v2553, %v2551
    %v2662 = vpack.c.b16 %v2556, %v2554
    %v2663 = vpack.c.b16 %v2557, %v2555
    %v2664 = vpack.c.b16 %v2560, %v2558
    %v2665 = vpack.c.b16 %v2561, %v2559
    %v2666 = vpack.c.b16 %v2564, %v2562
    %v2667 = vpack.c.b16 %v2565, %v2563
    %v2668 = vpack.c.b16 %v2568, %v2566
    %v2669 = vpack.c.b16 %v2569, %v2567
    %v2670 = vpack.c.b16 %v2572, %v2570
    %v2671 = vpack.c.b16 %v2573, %v2571
    %v2672 = vpack.c.b16 %v2576, %v2574
    %v2673 = vpack.c.b16 %v2577, %v2575
    %v2674 = vpack.c.b16 %v2580, %v2578
    %v2675 = vpack.c.b16 %v2581, %v2579
    %v2676 = vpack.c.b16 %v2584, %v2582
    %v2677 = vpack.c.b16 %v2585, %v2583
    %v2678 = vpack.c.b16 %v2588, %v2586
    %v2679 = vpack.c.b16 %v2589, %v2587
    %v2680 = vpack.c.b16 %v2592, %v2590
    %v2681 = vpack.c.b16 %v2593, %v2591
    %v2682 = vpack.c.b16 %v2596, %v2594
    %v2683 = vpack.c.b16 %v2597, %v2595
    %v2684 = vpack.c.b16 %v2600, %v2598
    %v2685 = vpack.c.b16 %v2601, %v2599
    %v2686 = vpack.c.b16 %v2604, %v2602
    %v2687 = vpack.c.b16 %v2605, %v2603
    %v2688 = vpack.c.b16 %v2608, %v2606
    %v2689 = vpack.c.b16 %v2609, %v2607
    %v2690 = vpack.c.b16 %v2612, %v2610
    %v2691 = vpack.c.b16 %v2613, %v2611
    %v2692 = vpack.c.b16 %v2616, %v2614
    %v2693 = vpack.c.b16 %v2617, %v2615
    %v2694 = vpack.c.b16 %v2620, %v2618
    %v2695 = vpack.c.b16 %v2621, %v2619
    %v2696 = vpack.c.b16 %v2624, %v2622
    %v2697 = vpack.c.b16 %v2625, %v2623
    %v2698 = vpack.c.b16 %v2628, %v2626
    %v2699 = vpack.c.b16 %v2629, %v2627
    %v2700 = vpack.c.b16 %v2632, %v2630
    %v2701 = vpack.c.b16 %v2633, %v2631
    %v2702 = vpack.c.b16 %v2636, %v2634
    %v2703 = vpack.c.b16 %v2637, %v2635
    %v2704 = vpack.c.b16 %v2640, %v2638
    %v2705 = vpack.c.b16 %v2641, %v2639
    %2770 = vmatprep.subr.bf16.mxu0 %v2657
    %2771 = vmatpush1.bf16.msra.mxu0 %v2656
    %2772 = vmatprep.subr.bf16.mxu0 %v2655
    %2773 = vmatpush1.bf16.msra.mxu0 %v2654
    %2774 = vmatprep.subr.bf16.mxu0 %v2653
    %2775 = vmatpush1.bf16.msra.mxu0 %v2652
    %2776 = vmatprep.subr.bf16.mxu0 %v2651
    %2777 = vmatpush1.bf16.msra.mxu0 %v2650
    %2778 = vmatprep.subr.bf16.mxu0 %v2649
    %2779 = vmatpush1.bf16.msra.mxu0 %v2648
    %2780 = vmatprep.subr.bf16.mxu0 %v2647
    %2781 = vmatpush1.bf16.msra.mxu0 %v2646
    %2782 = vmatprep.subr.bf16.mxu0 %v2645
    %2783 = vmatpush1.bf16.msra.mxu0 %v2644
    %2784 = vmatprep.subr.bf16.mxu0 %v2643
    %2785 = vmatpush1.bf16.msra.mxu0 %v2642
    %2786 = vmatprep.subr.bf16.mxu0 %v2673
    %2787 = vmatpush2.bf16.msra.mxu0 %v2672
    %2788 = vmatprep.subr.bf16.mxu0 %v2671
    %2789 = vmatpush2.bf16.msra.mxu0 %v2670
    %2790 = vmatprep.subr.bf16.mxu0 %v2669
    %2791 = vmatpush2.bf16.msra.mxu0 %v2668
    %2792 = vmatprep.subr.bf16.mxu0 %v2667
    %2793 = vmatpush2.bf16.msra.mxu0 %v2666
    %2794 = vmatprep.subr.bf16.mxu0 %v2665
    %2795 = vmatpush2.bf16.msra.mxu0 %v2664
    %2796 = vmatprep.subr.bf16.mxu0 %v2663
    %2797 = vmatpush2.bf16.msra.mxu0 %v2662
    %2798 = vmatprep.subr.bf16.mxu0 %v2661
    %2799 = vmatpush2.bf16.msra.mxu0 %v2660
    %2800 = vmatprep.subr.bf16.mxu0 %v2659
    %2801 = vmatpush2.bf16.msra.mxu0 %v2658
    %2802 = vmatprep.mubr.bf16.mxu0 %v2443
    %2803 = vmatmul.mubr.bf16.gmra.mxu0 %v2442
    %v2804 = vpop.f32.mrf.mxu0
    %v2805 = vadd.f32 %v2431, %v2804
    %v2806 = vpop.f32.mrf.mxu0
    %v2807 = vadd.f32 %v2435, %v2806
    %v2808 = vpop.f32.mrf.mxu0
    %v2809 = vpop.f32.mrf.mxu0
    %2810 = vdwg.mxu0
    %2811 = vmatprep.subr.bf16.mxu0 %v2689
    %2812 = vmatpush1.bf16.msra.mxu0 %v2688
    %2813 = vmatprep.subr.bf16.mxu0 %v2687
    %2814 = vmatpush1.bf16.msra.mxu0 %v2686
    %2815 = vmatprep.subr.bf16.mxu0 %v2685
    %2816 = vmatpush1.bf16.msra.mxu0 %v2684
    %2817 = vmatprep.subr.bf16.mxu0 %v2683
    %2818 = vmatpush1.bf16.msra.mxu0 %v2682
    %2819 = vmatprep.subr.bf16.mxu0 %v2681
    %2820 = vmatpush1.bf16.msra.mxu0 %v2680
    %2821 = vmatprep.subr.bf16.mxu0 %v2679
    %2822 = vmatpush1.bf16.msra.mxu0 %v2678
    %2823 = vmatprep.subr.bf16.mxu0 %v2677
    %2824 = vmatpush1.bf16.msra.mxu0 %v2676
    %2825 = vmatprep.subr.bf16.mxu0 %v2675
    %2826 = vmatpush1.bf16.msra.mxu0 %v2674
    %2827 = vmatprep.subr.bf16.mxu0 %v2705
    %2828 = vmatpush2.bf16.msra.mxu0 %v2704
    %2829 = vmatprep.subr.bf16.mxu0 %v2703
    %2830 = vmatpush2.bf16.msra.mxu0 %v2702
    %2831 = vmatprep.subr.bf16.mxu0 %v2701
    %2832 = vmatpush2.bf16.msra.mxu0 %v2700
    %2833 = vmatprep.subr.bf16.mxu0 %v2699
    %2834 = vmatpush2.bf16.msra.mxu0 %v2698
    %2835 = vmatprep.subr.bf16.mxu0 %v2697
    %2836 = vmatpush2.bf16.msra.mxu0 %v2696
    %2837 = vmatprep.subr.bf16.mxu0 %v2695
    %2838 = vmatpush2.bf16.msra.mxu0 %v2694
    %2839 = vmatprep.subr.bf16.mxu0 %v2693
    %2840 = vmatpush2.bf16.msra.mxu0 %v2692
    %2841 = vmatprep.subr.bf16.mxu0 %v2691
    %2842 = vmatpush2.bf16.msra.mxu0 %v2690
    %2843 = vmatprep.mubr.bf16.mxu0 %v2445
    %2844 = vmatmul.mubr.bf16.gmra.mxu0 %v2444
    %v2845 = vpop.f32.mrf.mxu0
    %v2846 = vadd.f32 %v2805, %v2845
    %v2847 = vpop.f32.mrf.mxu0
    %v2848 = vadd.f32 %v2807, %v2847
    %v2849 = vpop.f32.mrf.mxu0
    %v2850 = vpop.f32.mrf.mxu0
    %2851 = vdwg.mxu0
    %v2852 = vmax.f32 %v2846, 0.0
    %v2853 = vmax.f32 %v2848, 0.0
    %v2854 = vpack.c.bf16 %v2852, %v2852
    %v2855 = vpack.c.bf16 %v2853, %v2853
    %v2888 = vunpack.c.l.b16 %v392
    %v2889 = vunpack.c.l.b16 %v393
    %v2890 = vunpack.c.l.b16 %v394
    %v2891 = vunpack.c.l.b16 %v395
    %v2892 = vunpack.c.l.b16 %v396
    %v2893 = vunpack.c.l.b16 %v397
    %v2894 = vunpack.c.l.b16 %v398
    %v2895 = vunpack.c.l.b16 %v399
    %v2896 = vunpack.c.l.b16 %v400
    %v2897 = vunpack.c.l.b16 %v401
    %v2898 = vunpack.c.l.b16 %v402
    %v2899 = vunpack.c.l.b16 %v403
    %v2900 = vunpack.c.l.b16 %v404
    %v2901 = vunpack.c.l.b16 %v405
    %v2902 = vunpack.c.l.b16 %v406
    %v2903 = vunpack.c.l.b16 %v407
    %v2904 = vunpack.c.l.b16 %v408
    %v2905 = vunpack.c.l.b16 %v409
    %v2906 = vunpack.c.l.b16 %v410
    %v2907 = vunpack.c.l.b16 %v411
    %v2908 = vunpack.c.l.b16 %v412
    %v2909 = vunpack.c.l.b16 %v413
    %v2910 = vunpack.c.l.b16 %v414
    %v2911 = vunpack.c.l.b16 %v415
    %v2912 = vunpack.c.l.b16 %v416
    %v2913 = vunpack.c.l.b16 %v417
    %v2914 = vunpack.c.l.b16 %v418
    %v2915 = vunpack.c.l.b16 %v419
    %v2916 = vunpack.c.l.b16 %v420
    %v2917 = vunpack.c.l.b16 %v421
    %v2918 = vunpack.c.l.b16 %v422
    %v2919 = vunpack.c.l.b16 %v423
    %v2920 = vpack.c.b16 %v2889, %v2888
    %v2921 = vpack.c.b16 %v2891, %v2890
    %v2922 = vpack.c.b16 %v2893, %v2892
    %v2923 = vpack.c.b16 %v2895, %v2894
    %v2924 = vpack.c.b16 %v2897, %v2896
    %v2925 = vpack.c.b16 %v2899, %v2898
    %v2926 = vpack.c.b16 %v2901, %v2900
    %v2927 = vpack.c.b16 %v2903, %v2902
    %v2928 = vpack.c.b16 %v2905, %v2904
    %v2929 = vpack.c.b16 %v2907, %v2906
    %v2930 = vpack.c.b16 %v2909, %v2908
    %v2931 = vpack.c.b16 %v2911, %v2910
    %v2932 = vpack.c.b16 %v2913, %v2912
    %v2933 = vpack.c.b16 %v2915, %v2914
    %v2934 = vpack.c.b16 %v2917, %v2916
    %v2935 = vpack.c.b16 %v2919, %v2918
    %2952 = vmatprep.subr.bf16.mxu0 0
    %2953 = vmatpush1.bf16.msra.mxu0 %v2927
    %2954 = vmatprep.subr.bf16.mxu0 0
    %2955 = vmatpush1.bf16.msra.mxu0 %v2926
    %2956 = vmatprep.subr.bf16.mxu0 0
    %2957 = vmatpush1.bf16.msra.mxu0 %v2925
    %2958 = vmatprep.subr.bf16.mxu0 0
    %2959 = vmatpush1.bf16.msra.mxu0 %v2924
    %2960 = vmatprep.subr.bf16.mxu0 0
    %2961 = vmatpush1.bf16.msra.mxu0 %v2923
    %2962 = vmatprep.subr.bf16.mxu0 0
    %2963 = vmatpush1.bf16.msra.mxu0 %v2922
    %2964 = vmatprep.subr.bf16.mxu0 0
    %2965 = vmatpush1.bf16.msra.mxu0 %v2921
    %2966 = vmatprep.subr.bf16.mxu0 0
    %2967 = vmatpush1.bf16.msra.mxu0 %v2920
    %2968 = vmatprep.subr.bf16.mxu0 0
    %2969 = vmatpush2.bf16.msra.mxu0 %v2935
    %2970 = vmatprep.subr.bf16.mxu0 0
    %2971 = vmatpush2.bf16.msra.mxu0 %v2934
    %2972 = vmatprep.subr.bf16.mxu0 0
    %2973 = vmatpush2.bf16.msra.mxu0 %v2933
    %2974 = vmatprep.subr.bf16.mxu0 0
    %2975 = vmatpush2.bf16.msra.mxu0 %v2932
    %2976 = vmatprep.subr.bf16.mxu0 0
    %2977 = vmatpush2.bf16.msra.mxu0 %v2931
    %2978 = vmatprep.subr.bf16.mxu0 0
    %2979 = vmatpush2.bf16.msra.mxu0 %v2930
    %2980 = vmatprep.subr.bf16.mxu0 0
    %2981 = vmatpush2.bf16.msra.mxu0 %v2929
    %2982 = vmatprep.subr.bf16.mxu0 0
    %2983 = vmatpush2.bf16.msra.mxu0 %v2928
    %2984 = vmatprep.mubr.bf16.mxu0 %v2855
    %2985 = vmatmul.mubr.bf16.gmra.mxu0 %v2854
    %v2986 = vpop.f32.mrf.mxu0
    %v2987 = vadd.f32 0.0, %v2986
    %v2988 = vpop.f32.mrf.mxu0
    %v2989 = vpop.f32.mrf.mxu0
    %v2990 = vpop.f32.mrf.mxu0
    %2991 = vdwg.mxu0
    %v2992 = vmax.f32 %v2987, 0.0
    %vm2993 = vcmp.ne.f32.partialorder %v2987, %v2987
    %v2994 = vadd.f32 %v2987, 0.0
    %v2995 = vand.u32 2147483647, %v2987
    %v2996 = vsub.f32 0.0, %v2995
    %v2997 = vmul.f32 %v2996, 1.442695
    %v2998 = vpow.pop %v2997
    %v2999 = vadd.f32 %v2998, 1.0
    %v3000 = vlog2.pop %v2999
    %v3001 = vmul.f32 %v3000, 0.6931472
    %v3002 = vmul.f32 -0.5, %v2998
    %v3003 = vadd.f32 %v3002, 1.0
    %v3004 = vmul.f32 %v3003, %v2998
    %v3005 = vand.u32 2147483647, %v2998
    %vm3006 = vcmp.lt.f32.partialorder %v3005, 0.0004427343
    %v3007 = vsel %vm3006, %v3004, %v3001
    %v3008 = vadd.f32 %v2992, %v3007
    %v3009 = vsel %vm2993, %v2994, %v3008
    %3010 = vst [vmem:[%s9] sm:$0x3] %v2267
    %3011 = vst [vmem:[%s9 + $0x8] sm:$0x3] %v2268
    %3012 = vst [vmem:[%s9 + $0x10] sm:$0x3] %v2269
    %3013 = vst [vmem:[%s9 + $0x18] sm:$0x3] %v2270
    %3014 = vst [vmem:[%s9] sm:$0xc] %v2283
    %3015 = vst [vmem:[%s9 + $0x8] sm:$0xc] %v2284
    %3016 = vst [vmem:[%s9 + $0x10] sm:$0xc] %v2285
    %3017 = vst [vmem:[%s9 + $0x18] sm:$0xc] %v2286
    %3018 = vst [vmem:[%s9] sm:$0x30] %v2319
    %3019 = vst [vmem:[%s9 + $0x8] sm:$0x30] %v2320
    %3020 = vst [vmem:[%s9 + $0x10] sm:$0x30] %v2321
    %3021 = vst [vmem:[%s9 + $0x18] sm:$0x30] %v2322
    %3022 = vst [vmem:[%s9] sm:$0xc0] %v2339
    %3023 = vst [vmem:[%s9 + $0x8] sm:$0xc0] %v2340
    %3024 = vst [vmem:[%s9 + $0x10] sm:$0xc0] %v2341
    %3025 = vst [vmem:[%s9 + $0x18] sm:$0xc0] %v2342
    %vm3026 = vcmask 33792
    %3027 = vst.msk [vmem:[#allocation7] sm:$0x3] %vm3026, %v3009
    // Predicated region
    $region42: #{a_call__.1} parent=1 // pred_check
      _
    $region43: #{a_call__.1} parent=1 // pred_check_branch
      %3029 = sbr.rel (0) target = $region45
    $region44: #{a_call__.1} parent=1 // pred_region
      %s3031 = ssub.s32 32, 32
      %3032 = vsyncadd [#allocation4], %s3031
      %s3034 = sshll.u32 [#allocation7], 4
      %s3035 = int_to_ptr.vmem [resolvable:$true] %s3034
      %3037 = dma.vmem_to_hbm [thread:$0]  %s3035, 32, %s8, [#allocation4]
    $region45: #{a_call__.1} parent=1 // pred_fallthru
      _
    // Predicated region
    $region46: #{a_call__.1} parent=1 // pred_check
      _
    $region47: #{a_call__.1} parent=1 // pred_check_branch
      %3039 = sbr.rel (0) target = $region49
    $region48: #{a_call__.1} parent=1 // pred_region
      _
    $region49: #{a_call__.1} parent=1 // pred_fallthru
      _
    // Predicated region
    $region50: #{a_call__.1} parent=1 // pred_check
      _
    $region51: #{a_call__.1} parent=1 // pred_check_branch
      %3041 = sbr.rel (0) target = $region53
    $region52: #{a_call__.1} parent=1 // pred_region
      %3042 = dma.done [#allocation4], 32
    $region53: #{a_call__.1} parent=1 // pred_fallthru
      _
    // Predicated region
    $region54: #{a_call__.1} parent=1 // pred_check
      _
    $region55: #{a_call__.1} parent=1 // pred_check_branch
      %3044 = sbr.rel (0) target = $region57
    $region56: #{a_call__.1} parent=1 // pred_region
      _
    $region57: #{a_call__.1} parent=1 // pred_fallthru
      _
    %3045 = vsyncpa [#allocation3], 1
    %3046 = vsyncpa [#allocation6], 1
    %3047 = vsyncpa [#allocation4], 1

</llo_original>
